<compile_context>
chip_gen: v7x
topology: tpu7x:2x2x1
jax: 0.10.0
libtpu: 0.0.40
codegen_flags: <defaults>
</compile_context>

<pallas_src>
import functools
import math

import jax
import jax.numpy as jnp
from jax.experimental import pallas as pl
from jax.experimental.pallas import tpu as pltpu

LN_EPS = 1e-5


def _patch_merging_kernel(xe_ref, xo_ref, we_ref, wo_ref, b_ref, o_ref, *, fold):
    """Fused LayerNorm(4C) + Linear(4C -> dim) on DMA-deinterleaved patches.

    xe_ref: (T, W2, 2C)  even-h rows; channels [x0 | x2] for one (b, h2, j)
    xo_ref: (T, W2, 2C)  odd-h  rows; channels [x1 | x3]
    we_ref: (2C, dim)    gamma-folded weight rows [W0; W2]
    wo_ref: (2C, dim)    gamma-folded weight rows [W1; W3]
    b_ref : (1, dim)     beta @ W  (f32)
    o_ref : (T*W2, dim), or (T*W2//2, 2*dim) when fold=True (lane-dense store)
    """
    t, w2, c2 = xe_ref.shape
    rows = t * w2
    dim = we_ref.shape[1]
    inv_n = 1.0 / (2 * c2)                                # 1 / (4C)

    a0 = xe_ref[...].reshape(rows, c2).astype(jnp.float32)
    a1 = xo_ref[...].reshape(rows, c2).astype(jnp.float32)

    # One-pass LayerNorm statistics over all 4C channels (permutation
    # invariant across the parity split), in f32; rsqrt runs on the EUP slot.
    s = jnp.sum(a0, axis=-1, keepdims=True) + jnp.sum(a1, axis=-1, keepdims=True)
    ss = (jnp.sum(a0 * a0, axis=-1, keepdims=True)
          + jnp.sum(a1 * a1, axis=-1, keepdims=True))
    mean = s * inv_n
    var = jnp.maximum(ss * inv_n - mean * mean, 0.0)
    rstd = jax.lax.rsqrt(var + LN_EPS)

    # Normalize, cast to the weight's native dtype, MXU with f32 accumulation.
    wdt = we_ref.dtype
    y0 = ((a0 - mean) * rstd).astype(wdt)
    y1 = ((a1 - mean) * rstd).astype(wdt)
    acc = jnp.dot(y0, we_ref[...], preferred_element_type=jnp.float32)
    acc = acc + jnp.dot(y1, wo_ref[...], preferred_element_type=jnp.float32)

    out = (acc + b_ref[...]).astype(o_ref.dtype)
    if fold:                                              # lane-dense store
        out = out.reshape(rows // 2, 2 * dim)
    o_ref[...] = out


def _pick_tile_r2(r2, w2, target_rows, row_align):
    """Choose how many (b, h/2) row-blocks are processed per grid step.

    Returns (tile_r2, needs_pad).  Keeps the flattened output block height
    (tile_r2 * w2) a multiple of `row_align`, prefers an exact divisor of r2
    (no padding), and caps the tile at r2 // 2 so the grid has >= 2 steps
    (lets dimension_semantics=("parallel",) shard across v7x's 2 TensorCores).
    """
    cap = r2 if r2 < 2 else max(1, r2 // 2)
    want = max(1, min(cap, target_rows // max(w2, 1)))
    for t in range(want, 0, -1):
        if r2 % t == 0 and (t * w2) % row_align == 0:
            return t, False
    # No aligned divisor: use an aligned tile and pad the row-block axis.
    g = row_align // math.gcd(w2, row_align)
    t = max(g, (want // g) * g)
    return t, True


def patch_merging_pallas(x, w_t, gamma, beta, input_resolution, *,
                         target_block_rows=4096):
    """x: (B, H*W, C) -> (B, H*W//4, dim), matching PatchMerging.forward.

    w_t   : (4C, dim)  transposed nn.Linear(4*dim, dim, bias=False) weight
    gamma : (4C,)      LayerNorm weight
    beta  : (4C,)      LayerNorm bias
    """
    H, W = input_resolution
    B, L, C = x.shape
    assert L == H * W, "input feature has wrong size"
    assert H % 2 == 0 and W % 2 == 0, f"x size ({H}*{W}) are not even."
    four_c, dim = w_t.shape
    assert four_c == 4 * C, "weight does not match 4*C input channels"

    W2 = W // 2
    R2 = B * (H // 2)
    C2 = 2 * C
    rows_out = R2 * W2

    # Free, contiguous view: axis 0 = (b, h//2), axis 1 = h parity,
    # axis 2 = w//2, axis 3 = [even-w channels | odd-w channels].
    xv = x.reshape(R2, 2, W2, C2)

    # Fold the LayerNorm affine into the reduction weight once (f32), and
    # permute rows to the parity layout: even-h rows carry [x0|x2] -> [W0;W2],
    # odd-h rows carry [x1|x3] -> [W1;W3].
    w32 = w_t.astype(jnp.float32)
    wg = gamma.astype(jnp.float32)[:, None] * w32
    bias = beta.astype(jnp.float32)[None, :] @ w32                     # (1, dim)
    we = jnp.concatenate([wg[0:C], wg[2 * C:3 * C]], axis=0).astype(w_t.dtype)
    wo = jnp.concatenate([wg[C:2 * C], wg[3 * C:4 * C]], axis=0).astype(w_t.dtype)

    # Lane-dense output for narrow dim: store (rows, dim) as (rows/2, 2*dim).
    fold = dim < 128
    row_align = 16 if fold else 8

    tile_r2, needs_pad = _pick_tile_r2(R2, W2, target_block_rows, row_align)
    R2_pad = R2
    if needs_pad:
        R2_pad = pl.cdiv(R2, tile_r2) * tile_r2
        xv = jnp.pad(xv, ((0, R2_pad - R2), (0, 0), (0, 0), (0, 0)))
    grid = R2_pad // tile_r2
    tile_out = tile_r2 * W2
    rows_pad = R2_pad * W2

    if fold:
        out_shape = jax.ShapeDtypeStruct((rows_pad // 2, 2 * dim), x.dtype)
        out_spec = pl.BlockSpec((tile_out // 2, 2 * dim), lambda i: (i, 0))
    else:
        out_shape = jax.ShapeDtypeStruct((rows_pad, dim), x.dtype)
        out_spec = pl.BlockSpec((tile_out, dim), lambda i: (i, 0))

    # VMEM working set: double-buffered activation windows, resident weights,
    # f32 upcasts, MXU-dtype normalized activations, f32 accumulator.
    xi = x.dtype.itemsize
    wi = we.dtype.itemsize
    est = (2 * 2 * tile_out * C2 * xi            # even/odd input windows x2
           + 2 * tile_out * dim * xi             # output window x2
           + 2 * (2 * C2 * dim * wi + dim * 4)   # weights + bias x2
           + 2 * tile_out * C2 * 4               # f32 upcasts a0/a1
           + 2 * tile_out * C2 * wi              # normalized y0/y1
           + tile_out * dim * 4)                 # f32 accumulator
    vmem_limit = int(min(48 * 2 ** 20, max(32 * 2 ** 20, est + est // 2)))

    kern = functools.partial(_patch_merging_kernel, fold=fold)

    out2d = pl.pallas_call(
        kern,
        out_shape=out_shape,
        grid_spec=pltpu.PrefetchScalarGridSpec(
            num_scalar_prefetch=0,
            grid=(grid,),
            in_specs=[
                pl.BlockSpec((tile_r2, pl.Squeezed(), W2, C2),
                             lambda i: (i, 0, 0, 0)),      # even-h plane
                pl.BlockSpec((tile_r2, pl.Squeezed(), W2, C2),
                             lambda i: (i, 1, 0, 0)),      # odd-h plane
                pl.BlockSpec((C2, dim), lambda i: (0, 0)),
                pl.BlockSpec((C2, dim), lambda i: (0, 0)),
                pl.BlockSpec((1, dim), lambda i: (0, 0)),
            ],
            out_specs=out_spec,
        ),
        compiler_params=pltpu.CompilerParams(
            dimension_semantics=("parallel",),
            vmem_limit_bytes=vmem_limit,
        ),
    )(xv, xv, we, wo, bias)

    out = out2d.reshape(rows_pad, dim)
    if rows_pad != rows_out:
        out = out[:rows_out]
    return out.reshape(B, rows_out // B, dim)


def patch_merging_ref(x, w_t, gamma, beta, input_resolution):
    """Pure-JAX reference mirroring the PyTorch forward (run in f32)."""
    H, W = input_resolution
    B, L, C = x.shape
    xv = x.reshape(B, H, W, C)
    x0 = xv[:, 0::2, 0::2, :]
    x1 = xv[:, 1::2, 0::2, :]
    x2 = xv[:, 0::2, 1::2, :]
    x3 = xv[:, 1::2, 1::2, :]
    m = jnp.concatenate([x0, x1, x2, x3], axis=-1).reshape(B, -1, 4 * C)
    mean = jnp.mean(m, axis=-1, keepdims=True)
    var = jnp.mean((m - mean) ** 2, axis=-1, keepdims=True)
    mn = (m - mean) / jnp.sqrt(var + LN_EPS) * gamma + beta
    return mn @ w_t


if __name__ == "__main__":
    def run_case(B, H, W, C):
        dim = C
        key = jax.random.PRNGKey(0)
        kx, kw, kg, kb = jax.random.split(key, 4)

        # bf16 activations / weights (the MXU path); LN affine stays in f32.
        x = jax.random.normal(kx, (B, H * W, C), dtype=jnp.float32).astype(jnp.bfloat16)
        w = jax.random.normal(kw, (dim, 4 * dim), dtype=jnp.float32) * 0.02  # (out, in)
        w_t = w.T.astype(jnp.bfloat16)                                       # (4C, dim)
        gamma = 1.0 + 0.1 * jax.random.normal(kg, (4 * dim,), dtype=jnp.float32)
        beta = 0.05 * jax.random.normal(kb, (4 * dim,), dtype=jnp.float32)

        out = patch_merging_pallas(x, w_t, gamma, beta, (H, W))
        out = jax.block_until_ready(out)
        assert out.shape == (B, (H // 2) * (W // 2), dim), out.shape

        ref = patch_merging_ref(x.astype(jnp.float32), w_t.astype(jnp.float32),
                                gamma, beta, (H, W))
        err = jnp.max(jnp.abs(out.astype(jnp.float32) - ref))
        assert jnp.allclose(out.astype(jnp.float32), ref, atol=2e-2, rtol=2e-2), \
            f"mismatch vs reference (max abs err {err:.4e})"

    # dim=128: already lane-dense; tile capped at R2//2 -> 2-step parallel grid.
    run_case(2, 32, 32, 128)
    # dim=64: output folded to (rows/2, 128) for dense stores; 2-step grid.
    run_case(1, 32, 32, 64)
    # Awkward row-block count (R2=3): padded-grid fallback instead of one giant block.
    run_case(1, 6, 16, 64)

    print("KERNEL_OK")
</pallas_src>

<mosaic_0001>
module attributes {stable_mosaic.version = 11 : i64} {
  func.func @_patch_merging_kernel(%arg0: i32, %arg1: memref<16x1x16x256xbf16, #tpu.memory_space<vmem>>, %arg2: memref<16x1x16x256xbf16, #tpu.memory_space<vmem>>, %arg3: memref<256x128xbf16, #tpu.memory_space<vmem>>, %arg4: memref<256x128xbf16, #tpu.memory_space<vmem>>, %arg5: memref<1x128xf32, #tpu.memory_space<vmem>>, %arg6: memref<256x128xbf16, #tpu.memory_space<vmem>>) attributes {dimension_semantics = [#tpu.dimension_semantics<parallel>], iteration_bounds = array<i64: 2>, scalar_prefetch = 0 : i64, scratch_operands = 0 : i64, tpu.core_type = #tpu.core_type<tc>, window_params = [{transform_indices = @transform_0, window_bounds = array<i64: 16, 1, 16, 256>}, {transform_indices = @transform_1, window_bounds = array<i64: 16, 1, 16, 256>}, {pipeline_mode = #tpu.pipeline_mode<synchronous>, transform_indices = @transform_2, window_bounds = array<i64: 256, 128>}, {pipeline_mode = #tpu.pipeline_mode<synchronous>, transform_indices = @transform_3, window_bounds = array<i64: 256, 128>}, {pipeline_mode = #tpu.pipeline_mode<synchronous>, transform_indices = @transform_4, window_bounds = array<i64: 1, 128>}, {transform_indices = @transform_5, window_bounds = array<i64: 256, 128>}]} {
    %c0 = arith.constant 0 : index
    %c0_0 = arith.constant 0 : index
    %c0_1 = arith.constant 0 : index
    %c0_2 = arith.constant 0 : index
    %0 = vector.load %arg1[%c0, %c0_0, %c0_1, %c0_2] : memref<16x1x16x256xbf16, #tpu.memory_space<vmem>>, vector<16x1x16x256xbf16>
    %1 = vector.shape_cast %0 : vector<16x1x16x256xbf16> to vector<16x16x256xbf16>
    %2 = vector.shape_cast %1 : vector<16x16x256xbf16> to vector<256x256xbf16>
    %3 = arith.extf %2 : vector<256x256xbf16> to vector<256x256xf32>
    %c0_3 = arith.constant 0 : index
    %c0_4 = arith.constant 0 : index
    %c0_5 = arith.constant 0 : index
    %c0_6 = arith.constant 0 : index
    %4 = vector.load %arg2[%c0_3, %c0_4, %c0_5, %c0_6] : memref<16x1x16x256xbf16, #tpu.memory_space<vmem>>, vector<16x1x16x256xbf16>
    %5 = vector.shape_cast %4 : vector<16x1x16x256xbf16> to vector<16x16x256xbf16>
    %6 = vector.shape_cast %5 : vector<16x16x256xbf16> to vector<256x256xbf16>
    %7 = arith.extf %6 : vector<256x256xbf16> to vector<256x256xf32>
    %cst = arith.constant dense<0.000000e+00> : vector<256xf32>
    %8 = vector.multi_reduction <add>, %3, %cst [1] : vector<256x256xf32> to vector<256xf32>
    %9 = vector.shape_cast %8 : vector<256xf32> to vector<256x1xf32>
    %cst_7 = arith.constant dense<0.000000e+00> : vector<256xf32>
    %10 = vector.multi_reduction <add>, %7, %cst_7 [1] : vector<256x256xf32> to vector<256xf32>
    %11 = vector.shape_cast %10 : vector<256xf32> to vector<256x1xf32>
    %12 = arith.addf %9, %11 : vector<256x1xf32>
    %13 = arith.mulf %3, %3 : vector<256x256xf32>
    %cst_8 = arith.constant dense<0.000000e+00> : vector<256xf32>
    %14 = vector.multi_reduction <add>, %13, %cst_8 [1] : vector<256x256xf32> to vector<256xf32>
    %15 = vector.shape_cast %14 : vector<256xf32> to vector<256x1xf32>
    %16 = arith.mulf %7, %7 : vector<256x256xf32>
    %cst_9 = arith.constant dense<0.000000e+00> : vector<256xf32>
    %17 = vector.multi_reduction <add>, %16, %cst_9 [1] : vector<256x256xf32> to vector<256xf32>
    %18 = vector.shape_cast %17 : vector<256xf32> to vector<256x1xf32>
    %19 = arith.addf %15, %18 : vector<256x1xf32>
    %cst_10 = arith.constant 0.001953125 : f32
    %20 = vector.broadcast %cst_10 : f32 to vector<256x1xf32>
    %21 = arith.mulf %12, %20 : vector<256x1xf32>
    %cst_11 = arith.constant 0.001953125 : f32
    %22 = vector.broadcast %cst_11 : f32 to vector<256x1xf32>
    %23 = arith.mulf %19, %22 : vector<256x1xf32>
    %24 = arith.mulf %21, %21 : vector<256x1xf32>
    %25 = arith.subf %23, %24 : vector<256x1xf32>
    %cst_12 = arith.constant 0.000000e+00 : f32
    %26 = vector.broadcast %cst_12 : f32 to vector<256x1xf32>
    %27 = arith.maximumf %25, %26 : vector<256x1xf32>
    %cst_13 = arith.constant 9.99999974E-6 : f32
    %28 = vector.broadcast %cst_13 : f32 to vector<256x1xf32>
    %29 = arith.addf %27, %28 : vector<256x1xf32>
    %30 = math.rsqrt %29 : vector<256x1xf32>
    %31 = vector.broadcast %21 : vector<256x1xf32> to vector<256x256xf32>
    %32 = arith.subf %3, %31 : vector<256x256xf32>
    %33 = vector.broadcast %30 : vector<256x1xf32> to vector<256x256xf32>
    %34 = arith.mulf %32, %33 : vector<256x256xf32>
    %35 = arith.truncf %34 : vector<256x256xf32> to vector<256x256xbf16>
    %36 = vector.broadcast %21 : vector<256x1xf32> to vector<256x256xf32>
    %37 = arith.subf %7, %36 : vector<256x256xf32>
    %38 = vector.broadcast %30 : vector<256x1xf32> to vector<256x256xf32>
    %39 = arith.mulf %37, %38 : vector<256x256xf32>
    %40 = arith.truncf %39 : vector<256x256xf32> to vector<256x256xbf16>
    %c0_14 = arith.constant 0 : index
    %c0_15 = arith.constant 0 : index
    %41 = vector.load %arg3[%c0_14, %c0_15] : memref<256x128xbf16, #tpu.memory_space<vmem>>, vector<256x128xbf16>
    %cst_16 = arith.constant dense<0.000000e+00> : vector<256x128xf32>
    %42 = tpu.matmul %35, %41, %cst_16 {dimension_numbers = #tpu.dot_dimension_numbers<[1], [0], [0], [1], [0, 0, 1, 1], [], []>} : vector<256x256xbf16>, vector<256x128xbf16>, vector<256x128xf32> -> vector<256x128xf32>
    %c0_17 = arith.constant 0 : index
    %c0_18 = arith.constant 0 : index
    %43 = vector.load %arg4[%c0_17, %c0_18] : memref<256x128xbf16, #tpu.memory_space<vmem>>, vector<256x128xbf16>
    %cst_19 = arith.constant dense<0.000000e+00> : vector<256x128xf32>
    %44 = tpu.matmul %40, %43, %cst_19 {dimension_numbers = #tpu.dot_dimension_numbers<[1], [0], [0], [1], [0, 0, 1, 1], [], []>} : vector<256x256xbf16>, vector<256x128xbf16>, vector<256x128xf32> -> vector<256x128xf32>
    %45 = arith.addf %42, %44 : vector<256x128xf32>
    %c0_20 = arith.constant 0 : index
    %c0_21 = arith.constant 0 : index
    %46 = vector.load %arg5[%c0_20, %c0_21] : memref<1x128xf32, #tpu.memory_space<vmem>>, vector<1x128xf32>
    %47 = vector.broadcast %46 : vector<1x128xf32> to vector<256x128xf32>
    %48 = arith.addf %45, %47 : vector<256x128xf32>
    %49 = arith.truncf %48 : vector<256x128xf32> to vector<256x128xbf16>
    %c0_22 = arith.constant 0 : index
    %c0_23 = arith.constant 0 : index
    %50 = vector.load %arg6[%c0_22, %c0_23] : memref<256x128xbf16, #tpu.memory_space<vmem>>, vector<256x128xbf16>
    tpu.vector_store %arg6[%c0_22, %c0_23], %49 {strides = array<i32>} : memref<256x128xbf16, #tpu.memory_space<vmem>>, vector<256x128xbf16>,
    return
  }
  func.func @transform_0(%arg0: i32) -> (i32, i32, i32, i32) {
    %c0_i32 = arith.constant 0 : i32
    %c0_i32_0 = arith.constant 0 : i32
    %c0_i32_1 = arith.constant 0 : i32
    %c0_i32_2 = arith.constant 0 : i32
    return %arg0, %c0_i32, %c0_i32_0, %c0_i32_1 : i32, i32, i32, i32
  }
  func.func @transform_1(%arg0: i32) -> (i32, i32, i32, i32) {
    %c1_i32 = arith.constant 1 : i32
    %c0_i32 = arith.constant 0 : i32
    %c0_i32_0 = arith.constant 0 : i32
    %c0_i32_1 = arith.constant 0 : i32
    return %arg0, %c1_i32, %c0_i32, %c0_i32_0 : i32, i32, i32, i32
  }
  func.func @transform_2(%arg0: i32) -> (i32, i32) {
    %c0_i32 = arith.constant 0 : i32
    %c0_i32_0 = arith.constant 0 : i32
    %c0_i32_1 = arith.constant 0 : i32
    return %c0_i32, %c0_i32_0 : i32, i32
  }
  func.func @transform_3(%arg0: i32) -> (i32, i32) {
    %c0_i32 = arith.constant 0 : i32
    %c0_i32_0 = arith.constant 0 : i32
    %c0_i32_1 = arith.constant 0 : i32
    return %c0_i32, %c0_i32_0 : i32, i32
  }
  func.func @transform_4(%arg0: i32) -> (i32, i32) {
    %c0_i32 = arith.constant 0 : i32
    %c0_i32_0 = arith.constant 0 : i32
    %c0_i32_1 = arith.constant 0 : i32
    return %c0_i32, %c0_i32_0 : i32, i32
  }
  func.func @transform_5(%arg0: i32) -> (i32, i32) {
    %c0_i32 = arith.constant 0 : i32
    %c0_i32_0 = arith.constant 0 : i32
    return %arg0, %c0_i32 : i32, i32
  }
}

</mosaic_0001>

<llo_original>
// kernel: tpu_custom_call.1
$region0: #{tpu_custom_call.1}
  #allocation0 [shape = 'u32[]', space=smem, size = 0x4, offset = 0x4, fixed_abs, tag = 'smem constant byte address 0x4 - core index']
  #allocation1 [shape = 'u32[144,128]{1,0:T(1,128)}', space=vmem, size = 0x12000, scoped, tag = 'internal scratch']
  #allocation11 [shape = 's32[]', space=sflag, size = 0x4, offset = 0, fixed_abs, tag = 'sflag constant byte address 0x0 - dummy sync flag']
  #allocation13 [shape = 's32[]', space=sflag, size = 0x4, offset = 0, fixed_abs, tag = 'sflag constant byte address 0x0 - dummy sync flag']
  %s0 = inlined_call_operand.hbm [shape: bf16[32,2,16,256], index: 0, kind: input, shape index: {}]
  %s1 = inlined_call_operand.hbm [shape: bf16[32,2,16,256], index: 1, kind: input, shape index: {}]
  %s2 = inlined_call_operand.hbm [shape: bf16[256,128], index: 2, kind: input, shape index: {}]
  %s3 = inlined_call_operand.hbm [shape: bf16[256,128], index: 3, kind: input, shape index: {}]
  %s4 = inlined_call_operand.vmem [shape: f32[1,128], index: 4, kind: input, shape index: {}]
  %s5 = inlined_call_operand.hbm [shape: bf16[512,128], index: 5, kind: output, shape index: {}]
  %s6 = sld [smem:[#allocation0]]
  $region69: #{tpu_custom_call.1} parent=0
    _
  %s8 = ssub.s32 1, %s6
  %s9 = scalar_select 0, %s8, %s6
  $region1: #{tpu_custom_call.1} parent=0
    #allocation2 [shape = 'u8[262144]{0}', space=vmem, size = 0x40000, scoped, tag = 'input window, operand 0']
    #allocation3 [shape = 's32[2]{0}', space=sflag, size = 0x8, scoped, tag = 'scoped memory for tpu_custom_call.1']
    #allocation4 [shape = 's32[2]{0}', space=sflag, size = 0x8, scoped, tag = 'scoped memory for tpu_custom_call.1']
    #allocation5 [shape = 'u8[262144]{0}', space=vmem, size = 0x40000, scoped, tag = 'input window, operand 1']
    #allocation6 [shape = 's32[2]{0}', space=sflag, size = 0x8, scoped, tag = 'scoped memory for tpu_custom_call.1']
    #allocation7 [shape = 'u8[65536]{0}', space=vmem, size = 0x10000, scoped, tag = 'input window, operand 2, single buffered']
    #allocation8 [shape = 'u8[65536]{0}', space=vmem, size = 0x10000, scoped, tag = 'input window, operand 3, single buffered']
    #allocation9 [shape = 's32[1]{0}', space=sflag, size = 0x4, scoped, tag = 'scoped memory for tpu_custom_call.1']
    #allocation10 [shape = 'u8[131072]{0}', space=vmem, size = 0x20000, scoped, tag = 'output window, operand 0']
    %10 = vsyncpa [#allocation3], 0
    %s11 = scalar_lea.sflag [#allocation3], 1
    %12 = vsyncpa %s11, 0
    %13 = vsyncpa [#allocation6], 0
    %s14 = scalar_lea.sflag [#allocation6], 1
    %15 = vsyncpa %s14, 0
    %16 = vsyncpa [#allocation9], 0
    %17 = vsyncpa [#allocation4], 0
    %s18 = scalar_lea.sflag [#allocation4], 1
    %19 = vsyncpa %s18, 0
    loop: start=0, step=1, limit=4
    $region2: #{tpu_custom_call.1} parent=1 // loop_pre_header
      _
    $region3: #{tpu_custom_call.1} parent=1 // loop_header
      %s21 = sphi 0, %s25
      %p22 = scmp.ge.s32.totalorder %s21, 4
      %s31 = sphi 0, %s33
      %s34 = sphi 0, %s31
      %s35 = sphi 0, %s34
      %s51 = sphi 0, %s35
      %s57 = sphi 0, %s59
      %s60 = sphi 0, %s57
      %s61 = sphi 0, %s60
      %s77 = sphi 0, %s61
      %s81 = sphi 0, %s81
      %s83 = sphi 0, %s81
      %s84 = sphi 0, %s83
      %s98 = sphi 0, %s84
      %s102 = sphi 0, %s102
      %s104 = sphi 0, %s102
      %s105 = sphi 0, %s104
      %s119 = sphi 0, %s105
      %s123 = sphi 0, %s123
      %s125 = sphi 0, %s123
      %s126 = sphi 0, %s125
      %s140 = sphi 0, %s126
      %s146 = sphi 0, %s148
      %s149 = sphi 0, %s146
      %s150 = sphi 0, %s149
      %s166 = sphi 0, %s150
    $region4: #{tpu_custom_call.1} parent=1 // loop_header_branch
      %24 = sbr.rel (%p22) target = $region8
    $region5: #{tpu_custom_call.1} parent=1 // loop_body
      %s26 = ssub.s32 %s21, 1
      %s27 = ssub.s32 %s21, 2
      %s28 = sadd.s32 %s21, 1
      %s29 = ssub.s32 %s21, %s28
      %p30 = scmp.eq.s32.totalorder %s29, 0
      %s32 = sadd.s32 %s31, 1
      %s33 = scalar_select %p30, %s31, %s32
      %p36 = pneg %p30
      %p37 = scmp.eq.s32.totalorder %s21, 1
      %p38 = por %p36, %p37
      %p39 = scmp.ne.s32.totalorder %s31, %s34
      %p40 = scmp.eq.s32.totalorder %s21, 0
      %p41 = por %p39, %p40
      %p42 = scmp.ne.s32.totalorder %s31, %s34
      %p43 = scmp.eq.s32.totalorder %s26, 1
      %p44 = por %p42, %p43
      %p45 = scmp.ne.s32.totalorder %s34, %s35
      %p46 = scmp.eq.s32.totalorder %s26, 0
      %p47 = por %p45, %p46
      %p48 = scmp.ne.s32.totalorder %s34, %s35
      %p49 = scmp.eq.s32.totalorder %s27, 1
      %p50 = por %p48, %p49
      %p52 = scmp.ne.s32.totalorder %s35, %s51
      %p53 = scmp.eq.s32.totalorder %s27, 0
      %p54 = por %p52, %p53
      %s55 = ssub.s32 %s21, %s28
      %p56 = scmp.eq.s32.totalorder %s55, 0
      %s58 = sadd.s32 %s57, 1
      %s59 = scalar_select %p56, %s57, %s58
      %p62 = pneg %p56
      %p63 = scmp.eq.s32.totalorder %s21, 1
      %p64 = por %p62, %p63
      %p65 = scmp.ne.s32.totalorder %s57, %s60
      %p66 = scmp.eq.s32.totalorder %s21, 0
      %p67 = por %p65, %p66
      %p68 = scmp.ne.s32.totalorder %s57, %s60
      %p69 = scmp.eq.s32.totalorder %s26, 1
      %p70 = por %p68, %p69
      %p71 = scmp.ne.s32.totalorder %s60, %s61
      %p72 = scmp.eq.s32.totalorder %s26, 0
      %p73 = por %p71, %p72
      %p74 = scmp.ne.s32.totalorder %s60, %s61
      %p75 = scmp.eq.s32.totalorder %s27, 1
      %p76 = por %p74, %p75
      %p78 = scmp.ne.s32.totalorder %s61, %s77
      %p79 = scmp.eq.s32.totalorder %s27, 0
      %p80 = por %p78, %p79
      %s82 = sadd.s32 %s81, 1
      %p85 = scmp.eq.s32.totalorder %s21, 1
      %p86 = scmp.ne.s32.totalorder %s81, %s83
      %p87 = scmp.eq.s32.totalorder %s21, 0
      %p88 = por %p86, %p87
      %p89 = scmp.ne.s32.totalorder %s81, %s83
      %p90 = scmp.eq.s32.totalorder %s26, 1
      %p91 = por %p89, %p90
      %p92 = scmp.ne.s32.totalorder %s83, %s84
      %p93 = scmp.eq.s32.totalorder %s26, 0
      %p94 = por %p92, %p93
      %p95 = scmp.ne.s32.totalorder %s83, %s84
      %p96 = scmp.eq.s32.totalorder %s27, 1
      %p97 = por %p95, %p96
      %p99 = scmp.ne.s32.totalorder %s84, %s98
      %p100 = scmp.eq.s32.totalorder %s27, 0
      %p101 = por %p99, %p100
      %s103 = sadd.s32 %s102, 1
      %p106 = scmp.eq.s32.totalorder %s21, 1
      %p107 = scmp.ne.s32.totalorder %s102, %s104
      %p108 = scmp.eq.s32.totalorder %s21, 0
      %p109 = por %p107, %p108
      %p110 = scmp.ne.s32.totalorder %s102, %s104
      %p111 = scmp.eq.s32.totalorder %s26, 1
      %p112 = por %p110, %p111
      %p113 = scmp.ne.s32.totalorder %s104, %s105
      %p114 = scmp.eq.s32.totalorder %s26, 0
      %p115 = por %p113, %p114
      %p116 = scmp.ne.s32.totalorder %s104, %s105
      %p117 = scmp.eq.s32.totalorder %s27, 1
      %p118 = por %p116, %p117
      %p120 = scmp.ne.s32.totalorder %s105, %s119
      %p121 = scmp.eq.s32.totalorder %s27, 0
      %p122 = por %p120, %p121
      %s124 = sadd.s32 %s123, 1
      %p127 = scmp.eq.s32.totalorder %s21, 1
      %p128 = scmp.ne.s32.totalorder %s123, %s125
      %p129 = scmp.eq.s32.totalorder %s21, 0
      %p130 = por %p128, %p129
      %p131 = scmp.ne.s32.totalorder %s123, %s125
      %p132 = scmp.eq.s32.totalorder %s26, 1
      %p133 = por %p131, %p132
      %p134 = scmp.ne.s32.totalorder %s125, %s126
      %p135 = scmp.eq.s32.totalorder %s26, 0
      %p136 = por %p134, %p135
      %p137 = scmp.ne.s32.totalorder %s125, %s126
      %p138 = scmp.eq.s32.totalorder %s27, 1
      %p139 = por %p137, %p138
      %p141 = scmp.ne.s32.totalorder %s126, %s140
      %p142 = scmp.eq.s32.totalorder %s27, 0
      %p143 = por %p141, %p142
      %s144 = ssub.s32 %s21, %s28
      %p145 = scmp.eq.s32.totalorder %s144, 0
      %s147 = sadd.s32 %s146, 1
      %s148 = scalar_select %p145, %s146, %s147
      %p151 = pneg %p145
      %p152 = scmp.eq.s32.totalorder %s21, 1
      %p153 = por %p151, %p152
      %p154 = scmp.ne.s32.totalorder %s146, %s149
      %p155 = scmp.eq.s32.totalorder %s21, 0
      %p156 = por %p154, %p155
      %p157 = scmp.ne.s32.totalorder %s146, %s149
      %p158 = scmp.eq.s32.totalorder %s26, 1
      %p159 = por %p157, %p158
      %p160 = scmp.ne.s32.totalorder %s149, %s150
      %p161 = scmp.eq.s32.totalorder %s26, 0
      %p162 = por %p160, %p161
      %p163 = scmp.ne.s32.totalorder %s149, %s150
      %p164 = scmp.eq.s32.totalorder %s27, 1
      %p165 = por %p163, %p164
      %p167 = scmp.ne.s32.totalorder %s150, %s166
      %p168 = scmp.eq.s32.totalorder %s27, 0
      %p169 = por %p167, %p168
      %p170 = scmp.le.s32.totalorder 1, %s21
      %p171 = scmp.lt.s32.totalorder %s21, 3
      %p172 = pnand %p170, %p171
      %p173 = pneg %p172
      // Predicated region
      $region9: #{tpu_custom_call.1} parent=5 // pred_check
        _
      $region10: #{tpu_custom_call.1} parent=5 // pred_check_branch
        %175 = sbr.rel (%p172) target = $region12
      $region11: #{tpu_custom_call.1} parent=5 // pred_region
        %s176 = ssub.s32 %s21, 1
        // Predicated region
        $region13: #{tpu_custom_call.1} parent=11 // pred_check
          %p177 = pneg %p94
        $region14: #{tpu_custom_call.1} parent=11 // pred_check_branch
          %179 = sbr.rel (%p177) target = $region16
        $region15: #{tpu_custom_call.1} parent=11 // pred_region
          %s181 = ssub.s32 2048, 2048
          %182 = vsyncadd [#allocation6], %s181
          %s183 = sshll.u32 [#allocation7], 4
          %s184 = int_to_ptr.vmem [resolvable:$true] %s183
          %189 = dma.hbm_to_vmem [thread:$0]  %s2, 2048, %s184, [#allocation6], 64, 64, 4
        $region16: #{tpu_custom_call.1} parent=11 // pred_fallthru
          _
        // Predicated region
        $region17: #{tpu_custom_call.1} parent=11 // pred_check
          %p190 = pneg %p115
        $region18: #{tpu_custom_call.1} parent=11 // pred_check_branch
          %192 = sbr.rel (%p190) target = $region20
        $region19: #{tpu_custom_call.1} parent=11 // pred_region
          %s194 = ssub.s32 2048, 2048
          %195 = vsyncadd [#allocation9], %s194
          %s196 = sshll.u32 [#allocation8], 4
          %s197 = int_to_ptr.vmem [resolvable:$true] %s196
          %202 = dma.hbm_to_vmem [thread:$0]  %s3, 2048, %s197, [#allocation9], 64, 64, 4
        $region20: #{tpu_custom_call.1} parent=11 // pred_fallthru
          _
        // Predicated region
        $region21: #{tpu_custom_call.1} parent=11 // pred_check
          %p203 = pneg %p136
        $region22: #{tpu_custom_call.1} parent=11 // pred_check_branch
          %205 = sbr.rel (%p203) target = $region24
        $region23: #{tpu_custom_call.1} parent=11 // pred_region
          _
        $region24: #{tpu_custom_call.1} parent=11 // pred_fallthru
          _
      $region12: #{tpu_custom_call.1} parent=5 // pred_fallthru
        _
      %p206 = scmp.lt.s32.totalorder %s21, 2
      // Predicated region
      $region25: #{tpu_custom_call.1} parent=5 // pred_check
        %p207 = pneg %p206
      $region26: #{tpu_custom_call.1} parent=5 // pred_check_branch
        %209 = sbr.rel (%p207) target = $region28
      $region27: #{tpu_custom_call.1} parent=5 // pred_region
        // Predicated region
        $region29: #{tpu_custom_call.1} parent=27 // pred_check
          %p210 = pneg %p41
        $region30: #{tpu_custom_call.1} parent=27 // pred_check_branch
          %212 = sbr.rel (%p210) target = $region32
        $region31: #{tpu_custom_call.1} parent=27 // pred_region
          #allocation12 [shape = 'u32[6]{0}', space=smem, size = 0x18, scoped, tag = 'DMA stride descriptor']
          %s213 = sand.u32 %s31, 1
          %s214 = scalar_lea.sflag [#allocation3], %s213
          %s215 = sand.u32 %s31, 1
          %s216 = smul.addr %s215, 256
          %s217 = scalar_lea.vmem [#allocation2], %s216
          %s218 = smul.u32 16, %s21
          %s220 = ssub.s32 4096, 4096
          %221 = vsyncadd %s214, %s220
          %s222 = smul.addr %s218, 8
          %s223 = smul.addr %s222, 64
          %s224 = scalar_lea.hbm %s0, %s223
          %s226 = sshll.u32 1, 14
          %s227 = sxor.u32 4294967295, %s226
          %s229 = sld [smem:[#allocation0]]
          %s230 = sadd.s32 2, %s229
          %s232 = sshll.u32 7, 26
          %s233 = sxor.u32 4294967295, %s232
          %s234 = sand.u32 0, %s233
          %s235 = sshll.u32 %s230, 26
          %s236 = sor.u32 %s234, %s235
          %s237 = sshll.u32 %s217, 4
          %s238 = int_to_ptr.vmem [resolvable:$true] %s237
          %244 = sst [smem:[#allocation12]] 512
          %s245 = scalar_lea.smem [#allocation12], 1
          %246 = sst [smem:[%s245]] 256
          %s247 = scalar_lea.smem [#allocation12], 2
          %248 = sst [smem:[%s247]] 2
          %s249 = scalar_lea.smem [#allocation12], 3
          %250 = sst [smem:[%s249]] 128
          %s251 = scalar_lea.smem [#allocation12], 4
          %252 = sst [smem:[%s251]] 128
          %s253 = scalar_lea.smem [#allocation12], 5
          %254 = sst [smem:[%s253]] 8
          %256 = dma.general %s224, 4096, %s238, %s214, [#allocation11], [#allocation12], %s236, 0
        $region32: #{tpu_custom_call.1} parent=27 // pred_fallthru
          _
        // Predicated region
        $region33: #{tpu_custom_call.1} parent=27 // pred_check
          %p257 = pneg %p67
        $region34: #{tpu_custom_call.1} parent=27 // pred_check_branch
          %259 = sbr.rel (%p257) target = $region36
        $region35: #{tpu_custom_call.1} parent=27 // pred_region
          #allocation14 [shape = 'u32[6]{0}', space=smem, size = 0x18, scoped, tag = 'DMA stride descriptor']
          %s260 = sand.u32 %s21, 1
          %s261 = scalar_lea.sflag [#allocation6], %s260
          %s262 = sand.u32 %s57, 1
          %s263 = smul.addr %s262, 256
          %s264 = scalar_lea.vmem [#allocation5], %s263
          %s265 = smul.u32 16, %s21
          %s267 = ssub.s32 4096, 4096
          %268 = vsyncadd %s261, %s267
          %s269 = smul.addr %s265, 8
          %s270 = sadd.s32 4, %s269
          %s271 = smul.addr %s270, 64
          %s272 = scalar_lea.hbm %s1, %s271
          %s274 = sshll.u32 1, 14
          %s275 = sxor.u32 4294967295, %s274
          %s277 = sld [smem:[#allocation0]]
          %s278 = sadd.s32 2, %s277
          %s280 = sshll.u32 7, 26
          %s281 = sxor.u32 4294967295, %s280
          %s282 = sand.u32 0, %s281
          %s283 = sshll.u32 %s278, 26
          %s284 = sor.u32 %s282, %s283
          %s285 = sshll.u32 %s264, 4
          %s286 = int_to_ptr.vmem [resolvable:$true] %s285
          %292 = sst [smem:[#allocation14]] 512
          %s293 = scalar_lea.smem [#allocation14], 1
          %294 = sst [smem:[%s293]] 256
          %s295 = scalar_lea.smem [#allocation14], 2
          %296 = sst [smem:[%s295]] 2
          %s297 = scalar_lea.smem [#allocation14], 3
          %298 = sst [smem:[%s297]] 128
          %s299 = scalar_lea.smem [#allocation14], 4
          %300 = sst [smem:[%s299]] 128
          %s301 = scalar_lea.smem [#allocation14], 5
          %302 = sst [smem:[%s301]] 8
          %304 = dma.general %s272, 4096, %s286, %s261, [#allocation13], [#allocation14], %s284, 0
        $region36: #{tpu_custom_call.1} parent=27 // pred_fallthru
          _
      $region28: #{tpu_custom_call.1} parent=5 // pred_fallthru
        _
      %p305 = scmp.le.s32.totalorder 1, %s21
      %p306 = scmp.lt.s32.totalorder %s21, 3
      %p307 = pnand %p305, %p306
      %p308 = pneg %p307
      // Predicated region
      $region37: #{tpu_custom_call.1} parent=5 // pred_check
        _
      $region38: #{tpu_custom_call.1} parent=5 // pred_check_branch
        %310 = sbr.rel (%p307) target = $region40
      $region39: #{tpu_custom_call.1} parent=5 // pred_region
        %s311 = ssub.s32 %s21, 1
        %s312 = sand.u32 %s34, 1
        %s313 = scalar_lea.sflag [#allocation3], %s312
        %s314 = sand.u32 %s34, 1
        %s315 = smul.addr %s314, 256
        %s316 = scalar_lea.vmem [#allocation2], %s315
        // Predicated region
        $region41: #{tpu_custom_call.1} parent=39 // pred_check
          %p317 = pneg %p47
        $region42: #{tpu_custom_call.1} parent=39 // pred_check_branch
          %319 = sbr.rel (%p317) target = $region44
        $region43: #{tpu_custom_call.1} parent=39 // pred_region
          %320 = dma.done %s313, 4096
        $region44: #{tpu_custom_call.1} parent=39 // pred_fallthru
          _
        %s321 = sand.u32 %s26, 1
        %s322 = scalar_lea.sflag [#allocation6], %s321
        %s323 = sand.u32 %s60, 1
        %s324 = smul.addr %s323, 256
        %s325 = scalar_lea.vmem [#allocation5], %s324
        // Predicated region
        $region45: #{tpu_custom_call.1} parent=39 // pred_check
          %p326 = pneg %p73
        $region46: #{tpu_custom_call.1} parent=39 // pred_check_branch
          %328 = sbr.rel (%p326) target = $region48
        $region47: #{tpu_custom_call.1} parent=39 // pred_region
          %329 = dma.done %s322, 4096
        $region48: #{tpu_custom_call.1} parent=39 // pred_fallthru
          _
        // Predicated region
        $region49: #{tpu_custom_call.1} parent=39 // pred_check
          %p330 = pneg %p94
        $region50: #{tpu_custom_call.1} parent=39 // pred_check_branch
          %332 = sbr.rel (%p330) target = $region52
        $region51: #{tpu_custom_call.1} parent=39 // pred_region
          %333 = dma.done [#allocation6], 2048
        $region52: #{tpu_custom_call.1} parent=39 // pred_fallthru
          _
        // Predicated region
        $region53: #{tpu_custom_call.1} parent=39 // pred_check
          %p334 = pneg %p115
        $region54: #{tpu_custom_call.1} parent=39 // pred_check_branch
          %336 = sbr.rel (%p334) target = $region56
        $region55: #{tpu_custom_call.1} parent=39 // pred_region
          %337 = dma.done [#allocation9], 2048
        $region56: #{tpu_custom_call.1} parent=39 // pred_fallthru
          _
        %s338 = sand.u32 %s34, 1
        %s339 = scalar_lea.sflag [#allocation3], %s338
        %s340 = sand.u32 %s34, 1
        %s341 = smul.addr %s340, 256
        %s342 = scalar_lea.vmem [#allocation2], %s341
        %p343 = pneg %p47
        %p344 = pneg %p44
        %s345 = sand.u32 %s26, 1
        %s346 = scalar_lea.sflag [#allocation6], %s345
        %s347 = sand.u32 %s60, 1
        %s348 = smul.addr %s347, 256
        %s349 = scalar_lea.vmem [#allocation5], %s348
        %p350 = pneg %p73
        %p351 = pneg %p70
        %p352 = pneg %p94
        %p353 = pneg %p91
        %p354 = pneg %p115
        %p355 = pneg %p112
        %p356 = pneg %p136
        %p357 = pneg %p133
        %p358 = pneg %p162
        %p359 = pneg %p159
        %s360 = sand.u32 %s149, 1
        %s361 = scalar_lea.sflag [#allocation4], %s360
        %s362 = sand.u32 %s149, 1
        %s363 = smul.addr %s362, 128
        %s364 = scalar_lea.vmem [#allocation10], %s363
        %s365 = smul.u32 16, %s26
        %s366 = smul.u32 16, %s26
        %s367 = smul.u32 32, %s26
        %v369 = vld [vmem:[%s316] sm:$0xff]
        %v370 = vld [vmem:[%s316 + $0x8] sm:$0xff]
        %v371 = vld [vmem:[%s316 + $0x10] sm:$0xff]
        %v372 = vld [vmem:[%s316 + $0x18] sm:$0xff]
        %v373 = vld [vmem:[%s316 + $0x20] sm:$0xff]
        %v374 = vld [vmem:[%s316 + $0x28] sm:$0xff]
        %v375 = vld [vmem:[%s316 + $0x30] sm:$0xff]
        %v376 = vld [vmem:[%s316 + $0x38] sm:$0xff]
        %v377 = vld [vmem:[%s316 + $0x40] sm:$0xff]
        %v378 = vld [vmem:[%s316 + $0x48] sm:$0xff]
        %v379 = vld [vmem:[%s316 + $0x50] sm:$0xff]
        %v380 = vld [vmem:[%s316 + $0x58] sm:$0xff]
        %v381 = vld [vmem:[%s316 + $0x60] sm:$0xff]
        %v382 = vld [vmem:[%s316 + $0x68] sm:$0xff]
        %v383 = vld [vmem:[%s316 + $0x70] sm:$0xff]
        %v384 = vld [vmem:[%s316 + $0x78] sm:$0xff]
        %v385 = vld [vmem:[%s316 + $0x80] sm:$0xff]
        %v386 = vld [vmem:[%s316 + $0x88] sm:$0xff]
        %v387 = vld [vmem:[%s316 + $0x90] sm:$0xff]
        %v388 = vld [vmem:[%s316 + $0x98] sm:$0xff]
        %v389 = vld [vmem:[%s316 + $0xa0] sm:$0xff]
        %v390 = vld [vmem:[%s316 + $0xa8] sm:$0xff]
        %v391 = vld [vmem:[%s316 + $0xb0] sm:$0xff]
        %v392 = vld [vmem:[%s316 + $0xb8] sm:$0xff]
        %v393 = vld [vmem:[%s316 + $0xc0] sm:$0xff]
        %v394 = vld [vmem:[%s316 + $0xc8] sm:$0xff]
        %v395 = vld [vmem:[%s316 + $0xd0] sm:$0xff]
        %v396 = vld [vmem:[%s316 + $0xd8] sm:$0xff]
        %v397 = vld [vmem:[%s316 + $0xe0] sm:$0xff]
        %v398 = vld [vmem:[%s316 + $0xe8] sm:$0xff]
        %v399 = vld [vmem:[%s316 + $0xf0] sm:$0xff]
        %v400 = vld [vmem:[%s316 + $0xf8] sm:$0xff]
        %v401 = vunpack.c.l.bf16 %v369
        %v402 = vunpack.c.h.bf16 %v369
        %v403 = vunpack.c.l.bf16 %v370
        %v404 = vunpack.c.h.bf16 %v370
        %v405 = vunpack.c.l.bf16 %v371
        %v406 = vunpack.c.h.bf16 %v371
        %v407 = vunpack.c.l.bf16 %v372
        %v408 = vunpack.c.h.bf16 %v372
        %v409 = vunpack.c.l.bf16 %v373
        %v410 = vunpack.c.h.bf16 %v373
        %v411 = vunpack.c.l.bf16 %v374
        %v412 = vunpack.c.h.bf16 %v374
        %v413 = vunpack.c.l.bf16 %v375
        %v414 = vunpack.c.h.bf16 %v375
        %v415 = vunpack.c.l.bf16 %v376
        %v416 = vunpack.c.h.bf16 %v376
        %v417 = vunpack.c.l.bf16 %v377
        %v418 = vunpack.c.h.bf16 %v377
        %v419 = vunpack.c.l.bf16 %v378
        %v420 = vunpack.c.h.bf16 %v378
        %v421 = vunpack.c.l.bf16 %v379
        %v422 = vunpack.c.h.bf16 %v379
        %v423 = vunpack.c.l.bf16 %v380
        %v424 = vunpack.c.h.bf16 %v380
        %v425 = vunpack.c.l.bf16 %v381
        %v426 = vunpack.c.h.bf16 %v381
        %v427 = vunpack.c.l.bf16 %v382
        %v428 = vunpack.c.h.bf16 %v382
        %v429 = vunpack.c.l.bf16 %v383
        %v430 = vunpack.c.h.bf16 %v383
        %v431 = vunpack.c.l.bf16 %v384
        %v432 = vunpack.c.h.bf16 %v384
        %v433 = vunpack.c.l.bf16 %v385
        %v434 = vunpack.c.h.bf16 %v385
        %v435 = vunpack.c.l.bf16 %v386
        %v436 = vunpack.c.h.bf16 %v386
        %v437 = vunpack.c.l.bf16 %v387
        %v438 = vunpack.c.h.bf16 %v387
        %v439 = vunpack.c.l.bf16 %v388
        %v440 = vunpack.c.h.bf16 %v388
        %v441 = vunpack.c.l.bf16 %v389
        %v442 = vunpack.c.h.bf16 %v389
        %v443 = vunpack.c.l.bf16 %v390
        %v444 = vunpack.c.h.bf16 %v390
        %v445 = vunpack.c.l.bf16 %v391
        %v446 = vunpack.c.h.bf16 %v391
        %v447 = vunpack.c.l.bf16 %v392
        %v448 = vunpack.c.h.bf16 %v392
        %v449 = vunpack.c.l.bf16 %v393
        %v450 = vunpack.c.h.bf16 %v393
        %v451 = vunpack.c.l.bf16 %v394
        %v452 = vunpack.c.h.bf16 %v394
        %v453 = vunpack.c.l.bf16 %v395
        %v454 = vunpack.c.h.bf16 %v395
        %v455 = vunpack.c.l.bf16 %v396
        %v456 = vunpack.c.h.bf16 %v396
        %v457 = vunpack.c.l.bf16 %v397
        %v458 = vunpack.c.h.bf16 %v397
        %v459 = vunpack.c.l.bf16 %v398
        %v460 = vunpack.c.h.bf16 %v398
        %v461 = vunpack.c.l.bf16 %v399
        %v462 = vunpack.c.h.bf16 %v399
        %v463 = vunpack.c.l.bf16 %v400
        %v464 = vunpack.c.h.bf16 %v400
        %v465 = vld [vmem:[%s325] sm:$0xff]
        %v466 = vld [vmem:[%s325 + $0x8] sm:$0xff]
        %v467 = vld [vmem:[%s325 + $0x10] sm:$0xff]
        %v468 = vld [vmem:[%s325 + $0x18] sm:$0xff]
        %v469 = vld [vmem:[%s325 + $0x20] sm:$0xff]
        %v470 = vld [vmem:[%s325 + $0x28] sm:$0xff]
        %v471 = vld [vmem:[%s325 + $0x30] sm:$0xff]
        %v472 = vld [vmem:[%s325 + $0x38] sm:$0xff]
        %v473 = vld [vmem:[%s325 + $0x40] sm:$0xff]
        %v474 = vld [vmem:[%s325 + $0x48] sm:$0xff]
        %v475 = vld [vmem:[%s325 + $0x50] sm:$0xff]
        %v476 = vld [vmem:[%s325 + $0x58] sm:$0xff]
        %v477 = vld [vmem:[%s325 + $0x60] sm:$0xff]
        %v478 = vld [vmem:[%s325 + $0x68] sm:$0xff]
        %v479 = vld [vmem:[%s325 + $0x70] sm:$0xff]
        %v480 = vld [vmem:[%s325 + $0x78] sm:$0xff]
        %v481 = vld [vmem:[%s325 + $0x80] sm:$0xff]
        %v482 = vld [vmem:[%s325 + $0x88] sm:$0xff]
        %v483 = vld [vmem:[%s325 + $0x90] sm:$0xff]
        %v484 = vld [vmem:[%s325 + $0x98] sm:$0xff]
        %v485 = vld [vmem:[%s325 + $0xa0] sm:$0xff]
        %v486 = vld [vmem:[%s325 + $0xa8] sm:$0xff]
        %v487 = vld [vmem:[%s325 + $0xb0] sm:$0xff]
        %v488 = vld [vmem:[%s325 + $0xb8] sm:$0xff]
        %v489 = vld [vmem:[%s325 + $0xc0] sm:$0xff]
        %v490 = vld [vmem:[%s325 + $0xc8] sm:$0xff]
        %v491 = vld [vmem:[%s325 + $0xd0] sm:$0xff]
        %v492 = vld [vmem:[%s325 + $0xd8] sm:$0xff]
        %v493 = vld [vmem:[%s325 + $0xe0] sm:$0xff]
        %v494 = vld [vmem:[%s325 + $0xe8] sm:$0xff]
        %v495 = vld [vmem:[%s325 + $0xf0] sm:$0xff]
        %v496 = vld [vmem:[%s325 + $0xf8] sm:$0xff]
        %v497 = vunpack.c.l.bf16 %v465
        %v498 = vunpack.c.h.bf16 %v465
        %v499 = vunpack.c.l.bf16 %v466
        %v500 = vunpack.c.h.bf16 %v466
        %v501 = vunpack.c.l.bf16 %v467
        %v502 = vunpack.c.h.bf16 %v467
        %v503 = vunpack.c.l.bf16 %v468
        %v504 = vunpack.c.h.bf16 %v468
        %v505 = vunpack.c.l.bf16 %v469
        %v506 = vunpack.c.h.bf16 %v469
        %v507 = vunpack.c.l.bf16 %v470
        %v508 = vunpack.c.h.bf16 %v470
        %v509 = vunpack.c.l.bf16 %v471
        %v510 = vunpack.c.h.bf16 %v471
        %v511 = vunpack.c.l.bf16 %v472
        %v512 = vunpack.c.h.bf16 %v472
        %v513 = vunpack.c.l.bf16 %v473
        %v514 = vunpack.c.h.bf16 %v473
        %v515 = vunpack.c.l.bf16 %v474
        %v516 = vunpack.c.h.bf16 %v474
        %v517 = vunpack.c.l.bf16 %v475
        %v518 = vunpack.c.h.bf16 %v475
        %v519 = vunpack.c.l.bf16 %v476
        %v520 = vunpack.c.h.bf16 %v476
        %v521 = vunpack.c.l.bf16 %v477
        %v522 = vunpack.c.h.bf16 %v477
        %v523 = vunpack.c.l.bf16 %v478
        %v524 = vunpack.c.h.bf16 %v478
        %v525 = vunpack.c.l.bf16 %v479
        %v526 = vunpack.c.h.bf16 %v479
        %v527 = vunpack.c.l.bf16 %v480
        %v528 = vunpack.c.h.bf16 %v480
        %v529 = vunpack.c.l.bf16 %v481
        %v530 = vunpack.c.h.bf16 %v481
        %v531 = vunpack.c.l.bf16 %v482
        %v532 = vunpack.c.h.bf16 %v482
        %v533 = vunpack.c.l.bf16 %v483
        %v534 = vunpack.c.h.bf16 %v483
        %v535 = vunpack.c.l.bf16 %v484
        %v536 = vunpack.c.h.bf16 %v484
        %v537 = vunpack.c.l.bf16 %v485
        %v538 = vunpack.c.h.bf16 %v485
        %v539 = vunpack.c.l.bf16 %v486
        %v540 = vunpack.c.h.bf16 %v486
        %v541 = vunpack.c.l.bf16 %v487
        %v542 = vunpack.c.h.bf16 %v487
        %v543 = vunpack.c.l.bf16 %v488
        %v544 = vunpack.c.h.bf16 %v488
        %v545 = vunpack.c.l.bf16 %v489
        %v546 = vunpack.c.h.bf16 %v489
        %v547 = vunpack.c.l.bf16 %v490
        %v548 = vunpack.c.h.bf16 %v490
        %v549 = vunpack.c.l.bf16 %v491
        %v550 = vunpack.c.h.bf16 %v491
        %v551 = vunpack.c.l.bf16 %v492
        %v552 = vunpack.c.h.bf16 %v492
        %v553 = vunpack.c.l.bf16 %v493
        %v554 = vunpack.c.h.bf16 %v493
        %v555 = vunpack.c.l.bf16 %v494
        %v556 = vunpack.c.h.bf16 %v494
        %v557 = vunpack.c.l.bf16 %v495
        %v558 = vunpack.c.h.bf16 %v495
        %v559 = vunpack.c.l.bf16 %v496
        %v560 = vunpack.c.h.bf16 %v496
        %v561 = vadd.f32 %v401, %v402
        %562 = vadd.xlane.f32.xlu0 %v561
        %v563 = vpop.xlane.xlu0 %562
        %v564 = vadd.f32 %v403, %v404
        %565 = vadd.xlane.f32.xlu0 %v564
        %v566 = vpop.xlane.xlu0 %565
        %v567 = vadd.f32 %v405, %v406
        %568 = vadd.xlane.f32.xlu0 %v567
        %v569 = vpop.xlane.xlu0 %568
        %v570 = vadd.f32 %v407, %v408
        %571 = vadd.xlane.f32.xlu0 %v570
        %v572 = vpop.xlane.xlu0 %571
        %v573 = vadd.f32 %v409, %v410
        %574 = vadd.xlane.f32.xlu0 %v573
        %v575 = vpop.xlane.xlu0 %574
        %v576 = vadd.f32 %v411, %v412
        %577 = vadd.xlane.f32.xlu0 %v576
        %v578 = vpop.xlane.xlu0 %577
        %v579 = vadd.f32 %v413, %v414
        %580 = vadd.xlane.f32.xlu0 %v579
        %v581 = vpop.xlane.xlu0 %580
        %v582 = vadd.f32 %v415, %v416
        %583 = vadd.xlane.f32.xlu0 %v582
        %v584 = vpop.xlane.xlu0 %583
        %v585 = vadd.f32 %v417, %v418
        %586 = vadd.xlane.f32.xlu0 %v585
        %v587 = vpop.xlane.xlu0 %586
        %v588 = vadd.f32 %v419, %v420
        %589 = vadd.xlane.f32.xlu0 %v588
        %v590 = vpop.xlane.xlu0 %589
        %v591 = vadd.f32 %v421, %v422
        %592 = vadd.xlane.f32.xlu0 %v591
        %v593 = vpop.xlane.xlu0 %592
        %v594 = vadd.f32 %v423, %v424
        %595 = vadd.xlane.f32.xlu0 %v594
        %v596 = vpop.xlane.xlu0 %595
        %v597 = vadd.f32 %v425, %v426
        %598 = vadd.xlane.f32.xlu0 %v597
        %v599 = vpop.xlane.xlu0 %598
        %v600 = vadd.f32 %v427, %v428
        %601 = vadd.xlane.f32.xlu0 %v600
        %v602 = vpop.xlane.xlu0 %601
        %v603 = vadd.f32 %v429, %v430
        %604 = vadd.xlane.f32.xlu0 %v603
        %v605 = vpop.xlane.xlu0 %604
        %v606 = vadd.f32 %v431, %v432
        %607 = vadd.xlane.f32.xlu0 %v606
        %v608 = vpop.xlane.xlu0 %607
        %v609 = vadd.f32 %v433, %v434
        %610 = vadd.xlane.f32.xlu0 %v609
        %v611 = vpop.xlane.xlu0 %610
        %v612 = vadd.f32 %v435, %v436
        %613 = vadd.xlane.f32.xlu0 %v612
        %v614 = vpop.xlane.xlu0 %613
        %v615 = vadd.f32 %v437, %v438
        %616 = vadd.xlane.f32.xlu0 %v615
        %v617 = vpop.xlane.xlu0 %616
        %v618 = vadd.f32 %v439, %v440
        %619 = vadd.xlane.f32.xlu0 %v618
        %v620 = vpop.xlane.xlu0 %619
        %v621 = vadd.f32 %v441, %v442
        %622 = vadd.xlane.f32.xlu0 %v621
        %v623 = vpop.xlane.xlu0 %622
        %v624 = vadd.f32 %v443, %v444
        %625 = vadd.xlane.f32.xlu0 %v624
        %v626 = vpop.xlane.xlu0 %625
        %v627 = vadd.f32 %v445, %v446
        %628 = vadd.xlane.f32.xlu0 %v627
        %v629 = vpop.xlane.xlu0 %628
        %v630 = vadd.f32 %v447, %v448
        %631 = vadd.xlane.f32.xlu0 %v630
        %v632 = vpop.xlane.xlu0 %631
        %v633 = vadd.f32 %v449, %v450
        %634 = vadd.xlane.f32.xlu0 %v633
        %v635 = vpop.xlane.xlu0 %634
        %v636 = vadd.f32 %v451, %v452
        %637 = vadd.xlane.f32.xlu0 %v636
        %v638 = vpop.xlane.xlu0 %637
        %v639 = vadd.f32 %v453, %v454
        %640 = vadd.xlane.f32.xlu0 %v639
        %v641 = vpop.xlane.xlu0 %640
        %v642 = vadd.f32 %v455, %v456
        %643 = vadd.xlane.f32.xlu0 %v642
        %v644 = vpop.xlane.xlu0 %643
        %v645 = vadd.f32 %v457, %v458
        %646 = vadd.xlane.f32.xlu0 %v645
        %v647 = vpop.xlane.xlu0 %646
        %v648 = vadd.f32 %v459, %v460
        %649 = vadd.xlane.f32.xlu0 %v648
        %v650 = vpop.xlane.xlu0 %649
        %v651 = vadd.f32 %v461, %v462
        %652 = vadd.xlane.f32.xlu0 %v651
        %v653 = vpop.xlane.xlu0 %652
        %v654 = vadd.f32 %v463, %v464
        %655 = vadd.xlane.f32.xlu0 %v654
        %v656 = vpop.xlane.xlu0 %655
        %v657 = vadd.f32 %v497, %v498
        %658 = vadd.xlane.f32.xlu0 %v657
        %v659 = vpop.xlane.xlu0 %658
        %v660 = vadd.f32 %v499, %v500
        %661 = vadd.xlane.f32.xlu0 %v660
        %v662 = vpop.xlane.xlu0 %661
        %v663 = vadd.f32 %v501, %v502
        %664 = vadd.xlane.f32.xlu0 %v663
        %v665 = vpop.xlane.xlu0 %664
        %v666 = vadd.f32 %v503, %v504
        %667 = vadd.xlane.f32.xlu0 %v666
        %v668 = vpop.xlane.xlu0 %667
        %v669 = vadd.f32 %v505, %v506
        %670 = vadd.xlane.f32.xlu0 %v669
        %v671 = vpop.xlane.xlu0 %670
        %v672 = vadd.f32 %v507, %v508
        %673 = vadd.xlane.f32.xlu0 %v672
        %v674 = vpop.xlane.xlu0 %673
        %v675 = vadd.f32 %v509, %v510
        %676 = vadd.xlane.f32.xlu0 %v675
        %v677 = vpop.xlane.xlu0 %676
        %v678 = vadd.f32 %v511, %v512
        %679 = vadd.xlane.f32.xlu0 %v678
        %v680 = vpop.xlane.xlu0 %679
        %v681 = vadd.f32 %v513, %v514
        %682 = vadd.xlane.f32.xlu0 %v681
        %v683 = vpop.xlane.xlu0 %682
        %v684 = vadd.f32 %v515, %v516
        %685 = vadd.xlane.f32.xlu0 %v684
        %v686 = vpop.xlane.xlu0 %685
        %v687 = vadd.f32 %v517, %v518
        %688 = vadd.xlane.f32.xlu0 %v687
        %v689 = vpop.xlane.xlu0 %688
        %v690 = vadd.f32 %v519, %v520
        %691 = vadd.xlane.f32.xlu0 %v690
        %v692 = vpop.xlane.xlu0 %691
        %v693 = vadd.f32 %v521, %v522
        %694 = vadd.xlane.f32.xlu0 %v693
        %v695 = vpop.xlane.xlu0 %694
        %v696 = vadd.f32 %v523, %v524
        %697 = vadd.xlane.f32.xlu0 %v696
        %v698 = vpop.xlane.xlu0 %697
        %v699 = vadd.f32 %v525, %v526
        %700 = vadd.xlane.f32.xlu0 %v699
        %v701 = vpop.xlane.xlu0 %700
        %v702 = vadd.f32 %v527, %v528
        %703 = vadd.xlane.f32.xlu0 %v702
        %v704 = vpop.xlane.xlu0 %703
        %v705 = vadd.f32 %v529, %v530
        %706 = vadd.xlane.f32.xlu0 %v705
        %v707 = vpop.xlane.xlu0 %706
        %v708 = vadd.f32 %v531, %v532
        %709 = vadd.xlane.f32.xlu0 %v708
        %v710 = vpop.xlane.xlu0 %709
        %v711 = vadd.f32 %v533, %v534
        %712 = vadd.xlane.f32.xlu0 %v711
        %v713 = vpop.xlane.xlu0 %712
        %v714 = vadd.f32 %v535, %v536
        %715 = vadd.xlane.f32.xlu0 %v714
        %v716 = vpop.xlane.xlu0 %715
        %v717 = vadd.f32 %v537, %v538
        %718 = vadd.xlane.f32.xlu0 %v717
        %v719 = vpop.xlane.xlu0 %718
        %v720 = vadd.f32 %v539, %v540
        %721 = vadd.xlane.f32.xlu0 %v720
        %v722 = vpop.xlane.xlu0 %721
        %v723 = vadd.f32 %v541, %v542
        %724 = vadd.xlane.f32.xlu0 %v723
        %v725 = vpop.xlane.xlu0 %724
        %v726 = vadd.f32 %v543, %v544
        %727 = vadd.xlane.f32.xlu0 %v726
        %v728 = vpop.xlane.xlu0 %727
        %v729 = vadd.f32 %v545, %v546
        %730 = vadd.xlane.f32.xlu0 %v729
        %v731 = vpop.xlane.xlu0 %730
        %v732 = vadd.f32 %v547, %v548
        %733 = vadd.xlane.f32.xlu0 %v732
        %v734 = vpop.xlane.xlu0 %733
        %v735 = vadd.f32 %v549, %v550
        %736 = vadd.xlane.f32.xlu0 %v735
        %v737 = vpop.xlane.xlu0 %736
        %v738 = vadd.f32 %v551, %v552
        %739 = vadd.xlane.f32.xlu0 %v738
        %v740 = vpop.xlane.xlu0 %739
        %v741 = vadd.f32 %v553, %v554
        %742 = vadd.xlane.f32.xlu0 %v741
        %v743 = vpop.xlane.xlu0 %742
        %v744 = vadd.f32 %v555, %v556
        %745 = vadd.xlane.f32.xlu0 %v744
        %v746 = vpop.xlane.xlu0 %745
        %v747 = vadd.f32 %v557, %v558
        %748 = vadd.xlane.f32.xlu0 %v747
        %v749 = vpop.xlane.xlu0 %748
        %v750 = vadd.f32 %v559, %v560
        %751 = vadd.xlane.f32.xlu0 %v750
        %v752 = vpop.xlane.xlu0 %751
        %v753 = vadd.f32 %v563, %v659
        %v754 = vadd.f32 %v566, %v662
        %v755 = vadd.f32 %v569, %v665
        %v756 = vadd.f32 %v572, %v668
        %v757 = vadd.f32 %v575, %v671
        %v758 = vadd.f32 %v578, %v674
        %v759 = vadd.f32 %v581, %v677
        %v760 = vadd.f32 %v584, %v680
        %v761 = vadd.f32 %v587, %v683
        %v762 = vadd.f32 %v590, %v686
        %v763 = vadd.f32 %v593, %v689
        %v764 = vadd.f32 %v596, %v692
        %v765 = vadd.f32 %v599, %v695
        %v766 = vadd.f32 %v602, %v698
        %v767 = vadd.f32 %v605, %v701
        %v768 = vadd.f32 %v608, %v704
        %v769 = vadd.f32 %v611, %v707
        %v770 = vadd.f32 %v614, %v710
        %v771 = vadd.f32 %v617, %v713
        %v772 = vadd.f32 %v620, %v716
        %v773 = vadd.f32 %v623, %v719
        %v774 = vadd.f32 %v626, %v722
        %v775 = vadd.f32 %v629, %v725
        %v776 = vadd.f32 %v632, %v728
        %v777 = vadd.f32 %v635, %v731
        %v778 = vadd.f32 %v638, %v734
        %v779 = vadd.f32 %v641, %v737
        %v780 = vadd.f32 %v644, %v740
        %v781 = vadd.f32 %v647, %v743
        %v782 = vadd.f32 %v650, %v746
        %v783 = vadd.f32 %v653, %v749
        %v784 = vadd.f32 %v656, %v752
        %v785 = vmul.f32 %v401, %v401
        %v786 = vmul.f32 %v402, %v402
        %v787 = vmul.f32 %v403, %v403
        %v788 = vmul.f32 %v404, %v404
        %v789 = vmul.f32 %v405, %v405
        %v790 = vmul.f32 %v406, %v406
        %v791 = vmul.f32 %v407, %v407
        %v792 = vmul.f32 %v408, %v408
        %v793 = vmul.f32 %v409, %v409
        %v794 = vmul.f32 %v410, %v410
        %v795 = vmul.f32 %v411, %v411
        %v796 = vmul.f32 %v412, %v412
        %v797 = vmul.f32 %v413, %v413
        %v798 = vmul.f32 %v414, %v414
        %v799 = vmul.f32 %v415, %v415
        %v800 = vmul.f32 %v416, %v416
        %v801 = vmul.f32 %v417, %v417
        %v802 = vmul.f32 %v418, %v418
        %v803 = vmul.f32 %v419, %v419
        %v804 = vmul.f32 %v420, %v420
        %v805 = vmul.f32 %v421, %v421
        %v806 = vmul.f32 %v422, %v422
        %v807 = vmul.f32 %v423, %v423
        %v808 = vmul.f32 %v424, %v424
        %v809 = vmul.f32 %v425, %v425
        %v810 = vmul.f32 %v426, %v426
        %v811 = vmul.f32 %v427, %v427
        %v812 = vmul.f32 %v428, %v428
        %v813 = vmul.f32 %v429, %v429
        %v814 = vmul.f32 %v430, %v430
        %v815 = vmul.f32 %v431, %v431
        %v816 = vmul.f32 %v432, %v432
        %v817 = vmul.f32 %v433, %v433
        %v818 = vmul.f32 %v434, %v434
        %v819 = vmul.f32 %v435, %v435
        %v820 = vmul.f32 %v436, %v436
        %v821 = vmul.f32 %v437, %v437
        %v822 = vmul.f32 %v438, %v438
        %v823 = vmul.f32 %v439, %v439
        %v824 = vmul.f32 %v440, %v440
        %v825 = vmul.f32 %v441, %v441
        %v826 = vmul.f32 %v442, %v442
        %v827 = vmul.f32 %v443, %v443
        %v828 = vmul.f32 %v444, %v444
        %v829 = vmul.f32 %v445, %v445
        %v830 = vmul.f32 %v446, %v446
        %v831 = vmul.f32 %v447, %v447
        %v832 = vmul.f32 %v448, %v448
        %v833 = vmul.f32 %v449, %v449
        %v834 = vmul.f32 %v450, %v450
        %v835 = vmul.f32 %v451, %v451
        %v836 = vmul.f32 %v452, %v452
        %v837 = vmul.f32 %v453, %v453
        %v838 = vmul.f32 %v454, %v454
        %v839 = vmul.f32 %v455, %v455
        %v840 = vmul.f32 %v456, %v456
        %v841 = vmul.f32 %v457, %v457
        %v842 = vmul.f32 %v458, %v458
        %v843 = vmul.f32 %v459, %v459
        %v844 = vmul.f32 %v460, %v460
        %v845 = vmul.f32 %v461, %v461
        %v846 = vmul.f32 %v462, %v462
        %v847 = vmul.f32 %v463, %v463
        %v848 = vmul.f32 %v464, %v464
        %v849 = vadd.f32 %v785, %v786
        %850 = vadd.xlane.f32.xlu0 %v849
        %v851 = vpop.xlane.xlu0 %850
        %v852 = vadd.f32 %v787, %v788
        %853 = vadd.xlane.f32.xlu0 %v852
        %v854 = vpop.xlane.xlu0 %853
        %v855 = vadd.f32 %v789, %v790
        %856 = vadd.xlane.f32.xlu0 %v855
        %v857 = vpop.xlane.xlu0 %856
        %v858 = vadd.f32 %v791, %v792
        %859 = vadd.xlane.f32.xlu0 %v858
        %v860 = vpop.xlane.xlu0 %859
        %v861 = vadd.f32 %v793, %v794
        %862 = vadd.xlane.f32.xlu0 %v861
        %v863 = vpop.xlane.xlu0 %862
        %v864 = vadd.f32 %v795, %v796
        %865 = vadd.xlane.f32.xlu0 %v864
        %v866 = vpop.xlane.xlu0 %865
        %v867 = vadd.f32 %v797, %v798
        %868 = vadd.xlane.f32.xlu0 %v867
        %v869 = vpop.xlane.xlu0 %868
        %v870 = vadd.f32 %v799, %v800
        %871 = vadd.xlane.f32.xlu0 %v870
        %v872 = vpop.xlane.xlu0 %871
        %v873 = vadd.f32 %v801, %v802
        %874 = vadd.xlane.f32.xlu0 %v873
        %v875 = vpop.xlane.xlu0 %874
        %v876 = vadd.f32 %v803, %v804
        %877 = vadd.xlane.f32.xlu0 %v876
        %v878 = vpop.xlane.xlu0 %877
        %v879 = vadd.f32 %v805, %v806
        %880 = vadd.xlane.f32.xlu0 %v879
        %v881 = vpop.xlane.xlu0 %880
        %v882 = vadd.f32 %v807, %v808
        %883 = vadd.xlane.f32.xlu0 %v882
        %v884 = vpop.xlane.xlu0 %883
        %v885 = vadd.f32 %v809, %v810
        %886 = vadd.xlane.f32.xlu0 %v885
        %v887 = vpop.xlane.xlu0 %886
        %v888 = vadd.f32 %v811, %v812
        %889 = vadd.xlane.f32.xlu0 %v888
        %v890 = vpop.xlane.xlu0 %889
        %v891 = vadd.f32 %v813, %v814
        %892 = vadd.xlane.f32.xlu0 %v891
        %v893 = vpop.xlane.xlu0 %892
        %v894 = vadd.f32 %v815, %v816
        %895 = vadd.xlane.f32.xlu0 %v894
        %v896 = vpop.xlane.xlu0 %895
        %v897 = vadd.f32 %v817, %v818
        %898 = vadd.xlane.f32.xlu0 %v897
        %v899 = vpop.xlane.xlu0 %898
        %v900 = vadd.f32 %v819, %v820
        %901 = vadd.xlane.f32.xlu0 %v900
        %v902 = vpop.xlane.xlu0 %901
        %v903 = vadd.f32 %v821, %v822
        %904 = vadd.xlane.f32.xlu0 %v903
        %v905 = vpop.xlane.xlu0 %904
        %v906 = vadd.f32 %v823, %v824
        %907 = vadd.xlane.f32.xlu0 %v906
        %v908 = vpop.xlane.xlu0 %907
        %v909 = vadd.f32 %v825, %v826
        %910 = vadd.xlane.f32.xlu0 %v909
        %v911 = vpop.xlane.xlu0 %910
        %v912 = vadd.f32 %v827, %v828
        %913 = vadd.xlane.f32.xlu0 %v912
        %v914 = vpop.xlane.xlu0 %913
        %v915 = vadd.f32 %v829, %v830
        %916 = vadd.xlane.f32.xlu0 %v915
        %v917 = vpop.xlane.xlu0 %916
        %v918 = vadd.f32 %v831, %v832
        %919 = vadd.xlane.f32.xlu0 %v918
        %v920 = vpop.xlane.xlu0 %919
        %v921 = vadd.f32 %v833, %v834
        %922 = vadd.xlane.f32.xlu0 %v921
        %v923 = vpop.xlane.xlu0 %922
        %v924 = vadd.f32 %v835, %v836
        %925 = vadd.xlane.f32.xlu0 %v924
        %v926 = vpop.xlane.xlu0 %925
        %v927 = vadd.f32 %v837, %v838
        %928 = vadd.xlane.f32.xlu0 %v927
        %v929 = vpop.xlane.xlu0 %928
        %v930 = vadd.f32 %v839, %v840
        %931 = vadd.xlane.f32.xlu0 %v930
        %v932 = vpop.xlane.xlu0 %931
        %v933 = vadd.f32 %v841, %v842
        %934 = vadd.xlane.f32.xlu0 %v933
        %v935 = vpop.xlane.xlu0 %934
        %v936 = vadd.f32 %v843, %v844
        %937 = vadd.xlane.f32.xlu0 %v936
        %v938 = vpop.xlane.xlu0 %937
        %v939 = vadd.f32 %v845, %v846
        %940 = vadd.xlane.f32.xlu0 %v939
        %v941 = vpop.xlane.xlu0 %940
        %v942 = vadd.f32 %v847, %v848
        %943 = vadd.xlane.f32.xlu0 %v942
        %v944 = vpop.xlane.xlu0 %943
        %v945 = vmul.f32 %v497, %v497
        %v946 = vmul.f32 %v498, %v498
        %v947 = vmul.f32 %v499, %v499
        %v948 = vmul.f32 %v500, %v500
        %v949 = vmul.f32 %v501, %v501
        %v950 = vmul.f32 %v502, %v502
        %v951 = vmul.f32 %v503, %v503
        %v952 = vmul.f32 %v504, %v504
        %v953 = vmul.f32 %v505, %v505
        %v954 = vmul.f32 %v506, %v506
        %v955 = vmul.f32 %v507, %v507
        %v956 = vmul.f32 %v508, %v508
        %v957 = vmul.f32 %v509, %v509
        %v958 = vmul.f32 %v510, %v510
        %v959 = vmul.f32 %v511, %v511
        %v960 = vmul.f32 %v512, %v512
        %v961 = vmul.f32 %v513, %v513
        %v962 = vmul.f32 %v514, %v514
        %v963 = vmul.f32 %v515, %v515
        %v964 = vmul.f32 %v516, %v516
        %v965 = vmul.f32 %v517, %v517
        %v966 = vmul.f32 %v518, %v518
        %v967 = vmul.f32 %v519, %v519
        %v968 = vmul.f32 %v520, %v520
        %v969 = vmul.f32 %v521, %v521
        %v970 = vmul.f32 %v522, %v522
        %v971 = vmul.f32 %v523, %v523
        %v972 = vmul.f32 %v524, %v524
        %v973 = vmul.f32 %v525, %v525
        %v974 = vmul.f32 %v526, %v526
        %v975 = vmul.f32 %v527, %v527
        %v976 = vmul.f32 %v528, %v528
        %v977 = vmul.f32 %v529, %v529
        %v978 = vmul.f32 %v530, %v530
        %v979 = vmul.f32 %v531, %v531
        %v980 = vmul.f32 %v532, %v532
        %v981 = vmul.f32 %v533, %v533
        %v982 = vmul.f32 %v534, %v534
        %v983 = vmul.f32 %v535, %v535
        %v984 = vmul.f32 %v536, %v536
        %v985 = vmul.f32 %v537, %v537
        %v986 = vmul.f32 %v538, %v538
        %v987 = vmul.f32 %v539, %v539
        %v988 = vmul.f32 %v540, %v540
        %v989 = vmul.f32 %v541, %v541
        %v990 = vmul.f32 %v542, %v542
        %v991 = vmul.f32 %v543, %v543
        %v992 = vmul.f32 %v544, %v544
        %v993 = vmul.f32 %v545, %v545
        %v994 = vmul.f32 %v546, %v546
        %v995 = vmul.f32 %v547, %v547
        %v996 = vmul.f32 %v548, %v548
        %v997 = vmul.f32 %v549, %v549
        %v998 = vmul.f32 %v550, %v550
        %v999 = vmul.f32 %v551, %v551
        %v1000 = vmul.f32 %v552, %v552
        %v1001 = vmul.f32 %v553, %v553
        %v1002 = vmul.f32 %v554, %v554
        %v1003 = vmul.f32 %v555, %v555
        %v1004 = vmul.f32 %v556, %v556
        %v1005 = vmul.f32 %v557, %v557
        %v1006 = vmul.f32 %v558, %v558
        %v1007 = vmul.f32 %v559, %v559
        %v1008 = vmul.f32 %v560, %v560
        %v1009 = vadd.f32 %v945, %v946
        %1010 = vadd.xlane.f32.xlu0 %v1009
        %v1011 = vpop.xlane.xlu0 %1010
        %v1012 = vadd.f32 %v947, %v948
        %1013 = vadd.xlane.f32.xlu0 %v1012
        %v1014 = vpop.xlane.xlu0 %1013
        %v1015 = vadd.f32 %v949, %v950
        %1016 = vadd.xlane.f32.xlu0 %v1015
        %v1017 = vpop.xlane.xlu0 %1016
        %v1018 = vadd.f32 %v951, %v952
        %1019 = vadd.xlane.f32.xlu0 %v1018
        %v1020 = vpop.xlane.xlu0 %1019
        %v1021 = vadd.f32 %v953, %v954
        %1022 = vadd.xlane.f32.xlu0 %v1021
        %v1023 = vpop.xlane.xlu0 %1022
        %v1024 = vadd.f32 %v955, %v956
        %1025 = vadd.xlane.f32.xlu0 %v1024
        %v1026 = vpop.xlane.xlu0 %1025
        %v1027 = vadd.f32 %v957, %v958
        %1028 = vadd.xlane.f32.xlu0 %v1027
        %v1029 = vpop.xlane.xlu0 %1028
        %v1030 = vadd.f32 %v959, %v960
        %1031 = vadd.xlane.f32.xlu0 %v1030
        %v1032 = vpop.xlane.xlu0 %1031
        %v1033 = vadd.f32 %v961, %v962
        %1034 = vadd.xlane.f32.xlu0 %v1033
        %v1035 = vpop.xlane.xlu0 %1034
        %v1036 = vadd.f32 %v963, %v964
        %1037 = vadd.xlane.f32.xlu0 %v1036
        %v1038 = vpop.xlane.xlu0 %1037
        %v1039 = vadd.f32 %v965, %v966
        %1040 = vadd.xlane.f32.xlu0 %v1039
        %v1041 = vpop.xlane.xlu0 %1040
        %v1042 = vadd.f32 %v967, %v968
        %1043 = vadd.xlane.f32.xlu0 %v1042
        %v1044 = vpop.xlane.xlu0 %1043
        %v1045 = vadd.f32 %v969, %v970
        %1046 = vadd.xlane.f32.xlu0 %v1045
        %v1047 = vpop.xlane.xlu0 %1046
        %v1048 = vadd.f32 %v971, %v972
        %1049 = vadd.xlane.f32.xlu0 %v1048
        %v1050 = vpop.xlane.xlu0 %1049
        %v1051 = vadd.f32 %v973, %v974
        %1052 = vadd.xlane.f32.xlu0 %v1051
        %v1053 = vpop.xlane.xlu0 %1052
        %v1054 = vadd.f32 %v975, %v976
        %1055 = vadd.xlane.f32.xlu0 %v1054
        %v1056 = vpop.xlane.xlu0 %1055
        %v1057 = vadd.f32 %v977, %v978
        %1058 = vadd.xlane.f32.xlu0 %v1057
        %v1059 = vpop.xlane.xlu0 %1058
        %v1060 = vadd.f32 %v979, %v980
        %1061 = vadd.xlane.f32.xlu0 %v1060
        %v1062 = vpop.xlane.xlu0 %1061
        %v1063 = vadd.f32 %v981, %v982
        %1064 = vadd.xlane.f32.xlu0 %v1063
        %v1065 = vpop.xlane.xlu0 %1064
        %v1066 = vadd.f32 %v983, %v984
        %1067 = vadd.xlane.f32.xlu0 %v1066
        %v1068 = vpop.xlane.xlu0 %1067
        %v1069 = vadd.f32 %v985, %v986
        %1070 = vadd.xlane.f32.xlu0 %v1069
        %v1071 = vpop.xlane.xlu0 %1070
        %v1072 = vadd.f32 %v987, %v988
        %1073 = vadd.xlane.f32.xlu0 %v1072
        %v1074 = vpop.xlane.xlu0 %1073
        %v1075 = vadd.f32 %v989, %v990
        %1076 = vadd.xlane.f32.xlu0 %v1075
        %v1077 = vpop.xlane.xlu0 %1076
        %v1078 = vadd.f32 %v991, %v992
        %1079 = vadd.xlane.f32.xlu0 %v1078
        %v1080 = vpop.xlane.xlu0 %1079
        %v1081 = vadd.f32 %v993, %v994
        %1082 = vadd.xlane.f32.xlu0 %v1081
        %v1083 = vpop.xlane.xlu0 %1082
        %v1084 = vadd.f32 %v995, %v996
        %1085 = vadd.xlane.f32.xlu0 %v1084
        %v1086 = vpop.xlane.xlu0 %1085
        %v1087 = vadd.f32 %v997, %v998
        %1088 = vadd.xlane.f32.xlu0 %v1087
        %v1089 = vpop.xlane.xlu0 %1088
        %v1090 = vadd.f32 %v999, %v1000
        %1091 = vadd.xlane.f32.xlu0 %v1090
        %v1092 = vpop.xlane.xlu0 %1091
        %v1093 = vadd.f32 %v1001, %v1002
        %1094 = vadd.xlane.f32.xlu0 %v1093
        %v1095 = vpop.xlane.xlu0 %1094
        %v1096 = vadd.f32 %v1003, %v1004
        %1097 = vadd.xlane.f32.xlu0 %v1096
        %v1098 = vpop.xlane.xlu0 %1097
        %v1099 = vadd.f32 %v1005, %v1006
        %1100 = vadd.xlane.f32.xlu0 %v1099
        %v1101 = vpop.xlane.xlu0 %1100
        %v1102 = vadd.f32 %v1007, %v1008
        %1103 = vadd.xlane.f32.xlu0 %v1102
        %v1104 = vpop.xlane.xlu0 %1103
        %v1105 = vadd.f32 %v851, %v1011
        %v1106 = vadd.f32 %v854, %v1014
        %v1107 = vadd.f32 %v857, %v1017
        %v1108 = vadd.f32 %v860, %v1020
        %v1109 = vadd.f32 %v863, %v1023
        %v1110 = vadd.f32 %v866, %v1026
        %v1111 = vadd.f32 %v869, %v1029
        %v1112 = vadd.f32 %v872, %v1032
        %v1113 = vadd.f32 %v875, %v1035
        %v1114 = vadd.f32 %v878, %v1038
        %v1115 = vadd.f32 %v881, %v1041
        %v1116 = vadd.f32 %v884, %v1044
        %v1117 = vadd.f32 %v887, %v1047
        %v1118 = vadd.f32 %v890, %v1050
        %v1119 = vadd.f32 %v893, %v1053
        %v1120 = vadd.f32 %v896, %v1056
        %v1121 = vadd.f32 %v899, %v1059
        %v1122 = vadd.f32 %v902, %v1062
        %v1123 = vadd.f32 %v905, %v1065
        %v1124 = vadd.f32 %v908, %v1068
        %v1125 = vadd.f32 %v911, %v1071
        %v1126 = vadd.f32 %v914, %v1074
        %v1127 = vadd.f32 %v917, %v1077
        %v1128 = vadd.f32 %v920, %v1080
        %v1129 = vadd.f32 %v923, %v1083
        %v1130 = vadd.f32 %v926, %v1086
        %v1131 = vadd.f32 %v929, %v1089
        %v1132 = vadd.f32 %v932, %v1092
        %v1133 = vadd.f32 %v935, %v1095
        %v1134 = vadd.f32 %v938, %v1098
        %v1135 = vadd.f32 %v941, %v1101
        %v1136 = vadd.f32 %v944, %v1104
        %v1137 = vmul.f32 %v753, 0.001953125
        %v1138 = vmul.f32 %v754, 0.001953125
        %v1139 = vmul.f32 %v755, 0.001953125
        %v1140 = vmul.f32 %v756, 0.001953125
        %v1141 = vmul.f32 %v757, 0.001953125
        %v1142 = vmul.f32 %v758, 0.001953125
        %v1143 = vmul.f32 %v759, 0.001953125
        %v1144 = vmul.f32 %v760, 0.001953125
        %v1145 = vmul.f32 %v761, 0.001953125
        %v1146 = vmul.f32 %v762, 0.001953125
        %v1147 = vmul.f32 %v763, 0.001953125
        %v1148 = vmul.f32 %v764, 0.001953125
        %v1149 = vmul.f32 %v765, 0.001953125
        %v1150 = vmul.f32 %v766, 0.001953125
        %v1151 = vmul.f32 %v767, 0.001953125
        %v1152 = vmul.f32 %v768, 0.001953125
        %v1153 = vmul.f32 %v769, 0.001953125
        %v1154 = vmul.f32 %v770, 0.001953125
        %v1155 = vmul.f32 %v771, 0.001953125
        %v1156 = vmul.f32 %v772, 0.001953125
        %v1157 = vmul.f32 %v773, 0.001953125
        %v1158 = vmul.f32 %v774, 0.001953125
        %v1159 = vmul.f32 %v775, 0.001953125
        %v1160 = vmul.f32 %v776, 0.001953125
        %v1161 = vmul.f32 %v777, 0.001953125
        %v1162 = vmul.f32 %v778, 0.001953125
        %v1163 = vmul.f32 %v779, 0.001953125
        %v1164 = vmul.f32 %v780, 0.001953125
        %v1165 = vmul.f32 %v781, 0.001953125
        %v1166 = vmul.f32 %v782, 0.001953125
        %v1167 = vmul.f32 %v783, 0.001953125
        %v1168 = vmul.f32 %v784, 0.001953125
        %v1169 = vmul.f32 %v1105, 0.001953125
        %v1170 = vmul.f32 %v1106, 0.001953125
        %v1171 = vmul.f32 %v1107, 0.001953125
        %v1172 = vmul.f32 %v1108, 0.001953125
        %v1173 = vmul.f32 %v1109, 0.001953125
        %v1174 = vmul.f32 %v1110, 0.001953125
        %v1175 = vmul.f32 %v1111, 0.001953125
        %v1176 = vmul.f32 %v1112, 0.001953125
        %v1177 = vmul.f32 %v1113, 0.001953125
        %v1178 = vmul.f32 %v1114, 0.001953125
        %v1179 = vmul.f32 %v1115, 0.001953125
        %v1180 = vmul.f32 %v1116, 0.001953125
        %v1181 = vmul.f32 %v1117, 0.001953125
        %v1182 = vmul.f32 %v1118, 0.001953125
        %v1183 = vmul.f32 %v1119, 0.001953125
        %v1184 = vmul.f32 %v1120, 0.001953125
        %v1185 = vmul.f32 %v1121, 0.001953125
        %v1186 = vmul.f32 %v1122, 0.001953125
        %v1187 = vmul.f32 %v1123, 0.001953125
        %v1188 = vmul.f32 %v1124, 0.001953125
        %v1189 = vmul.f32 %v1125, 0.001953125
        %v1190 = vmul.f32 %v1126, 0.001953125
        %v1191 = vmul.f32 %v1127, 0.001953125
        %v1192 = vmul.f32 %v1128, 0.001953125
        %v1193 = vmul.f32 %v1129, 0.001953125
        %v1194 = vmul.f32 %v1130, 0.001953125
        %v1195 = vmul.f32 %v1131, 0.001953125
        %v1196 = vmul.f32 %v1132, 0.001953125
        %v1197 = vmul.f32 %v1133, 0.001953125
        %v1198 = vmul.f32 %v1134, 0.001953125
        %v1199 = vmul.f32 %v1135, 0.001953125
        %v1200 = vmul.f32 %v1136, 0.001953125
        %v1201 = vmul.f32 %v1137, %v1137
        %v1202 = vmul.f32 %v1138, %v1138
        %v1203 = vmul.f32 %v1139, %v1139
        %v1204 = vmul.f32 %v1140, %v1140
        %v1205 = vmul.f32 %v1141, %v1141
        %v1206 = vmul.f32 %v1142, %v1142
        %v1207 = vmul.f32 %v1143, %v1143
        %v1208 = vmul.f32 %v1144, %v1144
        %v1209 = vmul.f32 %v1145, %v1145
        %v1210 = vmul.f32 %v1146, %v1146
        %v1211 = vmul.f32 %v1147, %v1147
        %v1212 = vmul.f32 %v1148, %v1148
        %v1213 = vmul.f32 %v1149, %v1149
        %v1214 = vmul.f32 %v1150, %v1150
        %v1215 = vmul.f32 %v1151, %v1151
        %v1216 = vmul.f32 %v1152, %v1152
        %v1217 = vmul.f32 %v1153, %v1153
        %v1218 = vmul.f32 %v1154, %v1154
        %v1219 = vmul.f32 %v1155, %v1155
        %v1220 = vmul.f32 %v1156, %v1156
        %v1221 = vmul.f32 %v1157, %v1157
        %v1222 = vmul.f32 %v1158, %v1158
        %v1223 = vmul.f32 %v1159, %v1159
        %v1224 = vmul.f32 %v1160, %v1160
        %v1225 = vmul.f32 %v1161, %v1161
        %v1226 = vmul.f32 %v1162, %v1162
        %v1227 = vmul.f32 %v1163, %v1163
        %v1228 = vmul.f32 %v1164, %v1164
        %v1229 = vmul.f32 %v1165, %v1165
        %v1230 = vmul.f32 %v1166, %v1166
        %v1231 = vmul.f32 %v1167, %v1167
        %v1232 = vmul.f32 %v1168, %v1168
        %v1233 = vsub.f32 %v1169, %v1201
        %v1234 = vsub.f32 %v1170, %v1202
        %v1235 = vsub.f32 %v1171, %v1203
        %v1236 = vsub.f32 %v1172, %v1204
        %v1237 = vsub.f32 %v1173, %v1205
        %v1238 = vsub.f32 %v1174, %v1206
        %v1239 = vsub.f32 %v1175, %v1207
        %v1240 = vsub.f32 %v1176, %v1208
        %v1241 = vsub.f32 %v1177, %v1209
        %v1242 = vsub.f32 %v1178, %v1210
        %v1243 = vsub.f32 %v1179, %v1211
        %v1244 = vsub.f32 %v1180, %v1212
        %v1245 = vsub.f32 %v1181, %v1213
        %v1246 = vsub.f32 %v1182, %v1214
        %v1247 = vsub.f32 %v1183, %v1215
        %v1248 = vsub.f32 %v1184, %v1216
        %v1249 = vsub.f32 %v1185, %v1217
        %v1250 = vsub.f32 %v1186, %v1218
        %v1251 = vsub.f32 %v1187, %v1219
        %v1252 = vsub.f32 %v1188, %v1220
        %v1253 = vsub.f32 %v1189, %v1221
        %v1254 = vsub.f32 %v1190, %v1222
        %v1255 = vsub.f32 %v1191, %v1223
        %v1256 = vsub.f32 %v1192, %v1224
        %v1257 = vsub.f32 %v1193, %v1225
        %v1258 = vsub.f32 %v1194, %v1226
        %v1259 = vsub.f32 %v1195, %v1227
        %v1260 = vsub.f32 %v1196, %v1228
        %v1261 = vsub.f32 %v1197, %v1229
        %v1262 = vsub.f32 %v1198, %v1230
        %v1263 = vsub.f32 %v1199, %v1231
        %v1264 = vsub.f32 %v1200, %v1232
        %v1265 = vmax.f32 %v1233, 0.0
        %v1266 = vmax.f32 %v1234, 0.0
        %v1267 = vmax.f32 %v1235, 0.0
        %v1268 = vmax.f32 %v1236, 0.0
        %v1269 = vmax.f32 %v1237, 0.0
        %v1270 = vmax.f32 %v1238, 0.0
        %v1271 = vmax.f32 %v1239, 0.0
        %v1272 = vmax.f32 %v1240, 0.0
        %v1273 = vmax.f32 %v1241, 0.0
        %v1274 = vmax.f32 %v1242, 0.0
        %v1275 = vmax.f32 %v1243, 0.0
        %v1276 = vmax.f32 %v1244, 0.0
        %v1277 = vmax.f32 %v1245, 0.0
        %v1278 = vmax.f32 %v1246, 0.0
        %v1279 = vmax.f32 %v1247, 0.0
        %v1280 = vmax.f32 %v1248, 0.0
        %v1281 = vmax.f32 %v1249, 0.0
        %v1282 = vmax.f32 %v1250, 0.0
        %v1283 = vmax.f32 %v1251, 0.0
        %v1284 = vmax.f32 %v1252, 0.0
        %v1285 = vmax.f32 %v1253, 0.0
        %v1286 = vmax.f32 %v1254, 0.0
        %v1287 = vmax.f32 %v1255, 0.0
        %v1288 = vmax.f32 %v1256, 0.0
        %v1289 = vmax.f32 %v1257, 0.0
        %v1290 = vmax.f32 %v1258, 0.0
        %v1291 = vmax.f32 %v1259, 0.0
        %v1292 = vmax.f32 %v1260, 0.0
        %v1293 = vmax.f32 %v1261, 0.0
        %v1294 = vmax.f32 %v1262, 0.0
        %v1295 = vmax.f32 %v1263, 0.0
        %v1296 = vmax.f32 %v1264, 0.0
        %v1297 = vadd.f32 %v1265, 1e-05
        %v1298 = vadd.f32 %v1266, 1e-05
        %v1299 = vadd.f32 %v1267, 1e-05
        %v1300 = vadd.f32 %v1268, 1e-05
        %v1301 = vadd.f32 %v1269, 1e-05
        %v1302 = vadd.f32 %v1270, 1e-05
        %v1303 = vadd.f32 %v1271, 1e-05
        %v1304 = vadd.f32 %v1272, 1e-05
        %v1305 = vadd.f32 %v1273, 1e-05
        %v1306 = vadd.f32 %v1274, 1e-05
        %v1307 = vadd.f32 %v1275, 1e-05
        %v1308 = vadd.f32 %v1276, 1e-05
        %v1309 = vadd.f32 %v1277, 1e-05
        %v1310 = vadd.f32 %v1278, 1e-05
        %v1311 = vadd.f32 %v1279, 1e-05
        %v1312 = vadd.f32 %v1280, 1e-05
        %v1313 = vadd.f32 %v1281, 1e-05
        %v1314 = vadd.f32 %v1282, 1e-05
        %v1315 = vadd.f32 %v1283, 1e-05
        %v1316 = vadd.f32 %v1284, 1e-05
        %v1317 = vadd.f32 %v1285, 1e-05
        %v1318 = vadd.f32 %v1286, 1e-05
        %v1319 = vadd.f32 %v1287, 1e-05
        %v1320 = vadd.f32 %v1288, 1e-05
        %v1321 = vadd.f32 %v1289, 1e-05
        %v1322 = vadd.f32 %v1290, 1e-05
        %v1323 = vadd.f32 %v1291, 1e-05
        %v1324 = vadd.f32 %v1292, 1e-05
        %v1325 = vadd.f32 %v1293, 1e-05
        %v1326 = vadd.f32 %v1294, 1e-05
        %v1327 = vadd.f32 %v1295, 1e-05
        %v1328 = vadd.f32 %v1296, 1e-05
        %v1329 = vrsqrt.pop %v1297
        %v1330 = vrsqrt.pop %v1298
        %v1331 = vrsqrt.pop %v1299
        %v1332 = vrsqrt.pop %v1300
        %v1333 = vrsqrt.pop %v1301
        %v1334 = vrsqrt.pop %v1302
        %v1335 = vrsqrt.pop %v1303
        %v1336 = vrsqrt.pop %v1304
        %v1337 = vrsqrt.pop %v1305
        %v1338 = vrsqrt.pop %v1306
        %v1339 = vrsqrt.pop %v1307
        %v1340 = vrsqrt.pop %v1308
        %v1341 = vrsqrt.pop %v1309
        %v1342 = vrsqrt.pop %v1310
        %v1343 = vrsqrt.pop %v1311
        %v1344 = vrsqrt.pop %v1312
        %v1345 = vrsqrt.pop %v1313
        %v1346 = vrsqrt.pop %v1314
        %v1347 = vrsqrt.pop %v1315
        %v1348 = vrsqrt.pop %v1316
        %v1349 = vrsqrt.pop %v1317
        %v1350 = vrsqrt.pop %v1318
        %v1351 = vrsqrt.pop %v1319
        %v1352 = vrsqrt.pop %v1320
        %v1353 = vrsqrt.pop %v1321
        %v1354 = vrsqrt.pop %v1322
        %v1355 = vrsqrt.pop %v1323
        %v1356 = vrsqrt.pop %v1324
        %v1357 = vrsqrt.pop %v1325
        %v1358 = vrsqrt.pop %v1326
        %v1359 = vrsqrt.pop %v1327
        %v1360 = vrsqrt.pop %v1328
        %v1361 = vsub.f32 %v401, %v1137
        %v1362 = vsub.f32 %v402, %v1137
        %v1363 = vsub.f32 %v403, %v1138
        %v1364 = vsub.f32 %v404, %v1138
        %v1365 = vsub.f32 %v405, %v1139
        %v1366 = vsub.f32 %v406, %v1139
        %v1367 = vsub.f32 %v407, %v1140
        %v1368 = vsub.f32 %v408, %v1140
        %v1369 = vsub.f32 %v409, %v1141
        %v1370 = vsub.f32 %v410, %v1141
        %v1371 = vsub.f32 %v411, %v1142
        %v1372 = vsub.f32 %v412, %v1142
        %v1373 = vsub.f32 %v413, %v1143
        %v1374 = vsub.f32 %v414, %v1143
        %v1375 = vsub.f32 %v415, %v1144
        %v1376 = vsub.f32 %v416, %v1144
        %v1377 = vsub.f32 %v417, %v1145
        %v1378 = vsub.f32 %v418, %v1145
        %v1379 = vsub.f32 %v419, %v1146
        %v1380 = vsub.f32 %v420, %v1146
        %v1381 = vsub.f32 %v421, %v1147
        %v1382 = vsub.f32 %v422, %v1147
        %v1383 = vsub.f32 %v423, %v1148
        %v1384 = vsub.f32 %v424, %v1148
        %v1385 = vsub.f32 %v425, %v1149
        %v1386 = vsub.f32 %v426, %v1149
        %v1387 = vsub.f32 %v427, %v1150
        %v1388 = vsub.f32 %v428, %v1150
        %v1389 = vsub.f32 %v429, %v1151
        %v1390 = vsub.f32 %v430, %v1151
        %v1391 = vsub.f32 %v431, %v1152
        %v1392 = vsub.f32 %v432, %v1152
        %v1393 = vsub.f32 %v433, %v1153
        %v1394 = vsub.f32 %v434, %v1153
        %v1395 = vsub.f32 %v435, %v1154
        %v1396 = vsub.f32 %v436, %v1154
        %v1397 = vsub.f32 %v437, %v1155
        %v1398 = vsub.f32 %v438, %v1155
        %v1399 = vsub.f32 %v439, %v1156
        %v1400 = vsub.f32 %v440, %v1156
        %v1401 = vsub.f32 %v441, %v1157
        %v1402 = vsub.f32 %v442, %v1157
        %v1403 = vsub.f32 %v443, %v1158
        %v1404 = vsub.f32 %v444, %v1158
        %v1405 = vsub.f32 %v445, %v1159
        %v1406 = vsub.f32 %v446, %v1159
        %v1407 = vsub.f32 %v447, %v1160
        %v1408 = vsub.f32 %v448, %v1160
        %v1409 = vsub.f32 %v449, %v1161
        %v1410 = vsub.f32 %v450, %v1161
        %v1411 = vsub.f32 %v451, %v1162
        %v1412 = vsub.f32 %v452, %v1162
        %v1413 = vsub.f32 %v453, %v1163
        %v1414 = vsub.f32 %v454, %v1163
        %v1415 = vsub.f32 %v455, %v1164
        %v1416 = vsub.f32 %v456, %v1164
        %v1417 = vsub.f32 %v457, %v1165
        %v1418 = vsub.f32 %v458, %v1165
        %v1419 = vsub.f32 %v459, %v1166
        %v1420 = vsub.f32 %v460, %v1166
        %v1421 = vsub.f32 %v461, %v1167
        %v1422 = vsub.f32 %v462, %v1167
        %v1423 = vsub.f32 %v463, %v1168
        %v1424 = vsub.f32 %v464, %v1168
        %v1425 = vmul.f32 %v1361, %v1329
        %v1426 = vmul.f32 %v1362, %v1329
        %v1427 = vmul.f32 %v1363, %v1330
        %v1428 = vmul.f32 %v1364, %v1330
        %v1429 = vmul.f32 %v1365, %v1331
        %v1430 = vmul.f32 %v1366, %v1331
        %v1431 = vmul.f32 %v1367, %v1332
        %v1432 = vmul.f32 %v1368, %v1332
        %v1433 = vmul.f32 %v1369, %v1333
        %v1434 = vmul.f32 %v1370, %v1333
        %v1435 = vmul.f32 %v1371, %v1334
        %v1436 = vmul.f32 %v1372, %v1334
        %v1437 = vmul.f32 %v1373, %v1335
        %v1438 = vmul.f32 %v1374, %v1335
        %v1439 = vmul.f32 %v1375, %v1336
        %v1440 = vmul.f32 %v1376, %v1336
        %v1441 = vmul.f32 %v1377, %v1337
        %v1442 = vmul.f32 %v1378, %v1337
        %v1443 = vmul.f32 %v1379, %v1338
        %v1444 = vmul.f32 %v1380, %v1338
        %v1445 = vmul.f32 %v1381, %v1339
        %v1446 = vmul.f32 %v1382, %v1339
        %v1447 = vmul.f32 %v1383, %v1340
        %v1448 = vmul.f32 %v1384, %v1340
        %v1449 = vmul.f32 %v1385, %v1341
        %v1450 = vmul.f32 %v1386, %v1341
        %v1451 = vmul.f32 %v1387, %v1342
        %v1452 = vmul.f32 %v1388, %v1342
        %v1453 = vmul.f32 %v1389, %v1343
        %v1454 = vmul.f32 %v1390, %v1343
        %v1455 = vmul.f32 %v1391, %v1344
        %v1456 = vmul.f32 %v1392, %v1344
        %v1457 = vmul.f32 %v1393, %v1345
        %v1458 = vmul.f32 %v1394, %v1345
        %v1459 = vmul.f32 %v1395, %v1346
        %v1460 = vmul.f32 %v1396, %v1346
        %v1461 = vmul.f32 %v1397, %v1347
        %v1462 = vmul.f32 %v1398, %v1347
        %v1463 = vmul.f32 %v1399, %v1348
        %v1464 = vmul.f32 %v1400, %v1348
        %v1465 = vmul.f32 %v1401, %v1349
        %v1466 = vmul.f32 %v1402, %v1349
        %v1467 = vmul.f32 %v1403, %v1350
        %v1468 = vmul.f32 %v1404, %v1350
        %v1469 = vmul.f32 %v1405, %v1351
        %v1470 = vmul.f32 %v1406, %v1351
        %v1471 = vmul.f32 %v1407, %v1352
        %v1472 = vmul.f32 %v1408, %v1352
        %v1473 = vmul.f32 %v1409, %v1353
        %v1474 = vmul.f32 %v1410, %v1353
        %v1475 = vmul.f32 %v1411, %v1354
        %v1476 = vmul.f32 %v1412, %v1354
        %v1477 = vmul.f32 %v1413, %v1355
        %v1478 = vmul.f32 %v1414, %v1355
        %v1479 = vmul.f32 %v1415, %v1356
        %v1480 = vmul.f32 %v1416, %v1356
        %v1481 = vmul.f32 %v1417, %v1357
        %v1482 = vmul.f32 %v1418, %v1357
        %v1483 = vmul.f32 %v1419, %v1358
        %v1484 = vmul.f32 %v1420, %v1358
        %v1485 = vmul.f32 %v1421, %v1359
        %v1486 = vmul.f32 %v1422, %v1359
        %v1487 = vmul.f32 %v1423, %v1360
        %v1488 = vmul.f32 %v1424, %v1360
        %v1489 = vpack.c.bf16 %v1427, %v1425
        %v1490 = vpack.c.bf16 %v1428, %v1426
        %v1491 = vpack.c.bf16 %v1431, %v1429
        %v1492 = vpack.c.bf16 %v1432, %v1430
        %v1493 = vpack.c.bf16 %v1435, %v1433
        %v1494 = vpack.c.bf16 %v1436, %v1434
        %v1495 = vpack.c.bf16 %v1439, %v1437
        %v1496 = vpack.c.bf16 %v1440, %v1438
        %v1497 = vpack.c.bf16 %v1443, %v1441
        %v1498 = vpack.c.bf16 %v1444, %v1442
        %v1499 = vpack.c.bf16 %v1447, %v1445
        %v1500 = vpack.c.bf16 %v1448, %v1446
        %v1501 = vpack.c.bf16 %v1451, %v1449
        %v1502 = vpack.c.bf16 %v1452, %v1450
        %v1503 = vpack.c.bf16 %v1455, %v1453
        %v1504 = vpack.c.bf16 %v1456, %v1454
        %v1505 = vpack.c.bf16 %v1459, %v1457
        %v1506 = vpack.c.bf16 %v1460, %v1458
        %v1507 = vpack.c.bf16 %v1463, %v1461
        %v1508 = vpack.c.bf16 %v1464, %v1462
        %v1509 = vpack.c.bf16 %v1467, %v1465
        %v1510 = vpack.c.bf16 %v1468, %v1466
        %v1511 = vpack.c.bf16 %v1471, %v1469
        %v1512 = vpack.c.bf16 %v1472, %v1470
        %v1513 = vpack.c.bf16 %v1475, %v1473
        %v1514 = vpack.c.bf16 %v1476, %v1474
        %v1515 = vpack.c.bf16 %v1479, %v1477
        %v1516 = vpack.c.bf16 %v1480, %v1478
        %v1517 = vpack.c.bf16 %v1483, %v1481
        %v1518 = vpack.c.bf16 %v1484, %v1482
        %v1519 = vpack.c.bf16 %v1487, %v1485
        %v1520 = vpack.c.bf16 %v1488, %v1486
        %v1521 = vsub.f32 %v497, %v1137
        %v1522 = vsub.f32 %v498, %v1137
        %v1523 = vsub.f32 %v499, %v1138
        %v1524 = vsub.f32 %v500, %v1138
        %v1525 = vsub.f32 %v501, %v1139
        %v1526 = vsub.f32 %v502, %v1139
        %v1527 = vsub.f32 %v503, %v1140
        %v1528 = vsub.f32 %v504, %v1140
        %v1529 = vsub.f32 %v505, %v1141
        %v1530 = vsub.f32 %v506, %v1141
        %v1531 = vsub.f32 %v507, %v1142
        %v1532 = vsub.f32 %v508, %v1142
        %v1533 = vsub.f32 %v509, %v1143
        %v1534 = vsub.f32 %v510, %v1143
        %v1535 = vsub.f32 %v511, %v1144
        %v1536 = vsub.f32 %v512, %v1144
        %v1537 = vsub.f32 %v513, %v1145
        %v1538 = vsub.f32 %v514, %v1145
        %v1539 = vsub.f32 %v515, %v1146
        %v1540 = vsub.f32 %v516, %v1146
        %v1541 = vsub.f32 %v517, %v1147
        %v1542 = vsub.f32 %v518, %v1147
        %v1543 = vsub.f32 %v519, %v1148
        %v1544 = vsub.f32 %v520, %v1148
        %v1545 = vsub.f32 %v521, %v1149
        %v1546 = vsub.f32 %v522, %v1149
        %v1547 = vsub.f32 %v523, %v1150
        %v1548 = vsub.f32 %v524, %v1150
        %v1549 = vsub.f32 %v525, %v1151
        %v1550 = vsub.f32 %v526, %v1151
        %v1551 = vsub.f32 %v527, %v1152
        %v1552 = vsub.f32 %v528, %v1152
        %v1553 = vsub.f32 %v529, %v1153
        %v1554 = vsub.f32 %v530, %v1153
        %v1555 = vsub.f32 %v531, %v1154
        %v1556 = vsub.f32 %v532, %v1154
        %v1557 = vsub.f32 %v533, %v1155
        %v1558 = vsub.f32 %v534, %v1155
        %v1559 = vsub.f32 %v535, %v1156
        %v1560 = vsub.f32 %v536, %v1156
        %v1561 = vsub.f32 %v537, %v1157
        %v1562 = vsub.f32 %v538, %v1157
        %v1563 = vsub.f32 %v539, %v1158
        %v1564 = vsub.f32 %v540, %v1158
        %v1565 = vsub.f32 %v541, %v1159
        %v1566 = vsub.f32 %v542, %v1159
        %v1567 = vsub.f32 %v543, %v1160
        %v1568 = vsub.f32 %v544, %v1160
        %v1569 = vsub.f32 %v545, %v1161
        %v1570 = vsub.f32 %v546, %v1161
        %v1571 = vsub.f32 %v547, %v1162
        %v1572 = vsub.f32 %v548, %v1162
        %v1573 = vsub.f32 %v549, %v1163
        %v1574 = vsub.f32 %v550, %v1163
        %v1575 = vsub.f32 %v551, %v1164
        %v1576 = vsub.f32 %v552, %v1164
        %v1577 = vsub.f32 %v553, %v1165
        %v1578 = vsub.f32 %v554, %v1165
        %v1579 = vsub.f32 %v555, %v1166
        %v1580 = vsub.f32 %v556, %v1166
        %v1581 = vsub.f32 %v557, %v1167
        %v1582 = vsub.f32 %v558, %v1167
        %v1583 = vsub.f32 %v559, %v1168
        %v1584 = vsub.f32 %v560, %v1168
        %v1585 = vmul.f32 %v1521, %v1329
        %v1586 = vmul.f32 %v1522, %v1329
        %v1587 = vmul.f32 %v1523, %v1330
        %v1588 = vmul.f32 %v1524, %v1330
        %v1589 = vmul.f32 %v1525, %v1331
        %v1590 = vmul.f32 %v1526, %v1331
        %v1591 = vmul.f32 %v1527, %v1332
        %v1592 = vmul.f32 %v1528, %v1332
        %v1593 = vmul.f32 %v1529, %v1333
        %v1594 = vmul.f32 %v1530, %v1333
        %v1595 = vmul.f32 %v1531, %v1334
        %v1596 = vmul.f32 %v1532, %v1334
        %v1597 = vmul.f32 %v1533, %v1335
        %v1598 = vmul.f32 %v1534, %v1335
        %v1599 = vmul.f32 %v1535, %v1336
        %v1600 = vmul.f32 %v1536, %v1336
        %v1601 = vmul.f32 %v1537, %v1337
        %v1602 = vmul.f32 %v1538, %v1337
        %v1603 = vmul.f32 %v1539, %v1338
        %v1604 = vmul.f32 %v1540, %v1338
        %v1605 = vmul.f32 %v1541, %v1339
        %v1606 = vmul.f32 %v1542, %v1339
        %v1607 = vmul.f32 %v1543, %v1340
        %v1608 = vmul.f32 %v1544, %v1340
        %v1609 = vmul.f32 %v1545, %v1341
        %v1610 = vmul.f32 %v1546, %v1341
        %v1611 = vmul.f32 %v1547, %v1342
        %v1612 = vmul.f32 %v1548, %v1342
        %v1613 = vmul.f32 %v1549, %v1343
        %v1614 = vmul.f32 %v1550, %v1343
        %v1615 = vmul.f32 %v1551, %v1344
        %v1616 = vmul.f32 %v1552, %v1344
        %v1617 = vmul.f32 %v1553, %v1345
        %v1618 = vmul.f32 %v1554, %v1345
        %v1619 = vmul.f32 %v1555, %v1346
        %v1620 = vmul.f32 %v1556, %v1346
        %v1621 = vmul.f32 %v1557, %v1347
        %v1622 = vmul.f32 %v1558, %v1347
        %v1623 = vmul.f32 %v1559, %v1348
        %v1624 = vmul.f32 %v1560, %v1348
        %v1625 = vmul.f32 %v1561, %v1349
        %v1626 = vmul.f32 %v1562, %v1349
        %v1627 = vmul.f32 %v1563, %v1350
        %v1628 = vmul.f32 %v1564, %v1350
        %v1629 = vmul.f32 %v1565, %v1351
        %v1630 = vmul.f32 %v1566, %v1351
        %v1631 = vmul.f32 %v1567, %v1352
        %v1632 = vmul.f32 %v1568, %v1352
        %v1633 = vmul.f32 %v1569, %v1353
        %v1634 = vmul.f32 %v1570, %v1353
        %v1635 = vmul.f32 %v1571, %v1354
        %v1636 = vmul.f32 %v1572, %v1354
        %v1637 = vmul.f32 %v1573, %v1355
        %v1638 = vmul.f32 %v1574, %v1355
        %v1639 = vmul.f32 %v1575, %v1356
        %v1640 = vmul.f32 %v1576, %v1356
        %v1641 = vmul.f32 %v1577, %v1357
        %v1642 = vmul.f32 %v1578, %v1357
        %v1643 = vmul.f32 %v1579, %v1358
        %v1644 = vmul.f32 %v1580, %v1358
        %v1645 = vmul.f32 %v1581, %v1359
        %v1646 = vmul.f32 %v1582, %v1359
        %v1647 = vmul.f32 %v1583, %v1360
        %v1648 = vmul.f32 %v1584, %v1360
        %v1649 = vpack.c.bf16 %v1587, %v1585
        %v1650 = vpack.c.bf16 %v1588, %v1586
        %v1651 = vpack.c.bf16 %v1591, %v1589
        %v1652 = vpack.c.bf16 %v1592, %v1590
        %v1653 = vpack.c.bf16 %v1595, %v1593
        %v1654 = vpack.c.bf16 %v1596, %v1594
        %v1655 = vpack.c.bf16 %v1599, %v1597
        %v1656 = vpack.c.bf16 %v1600, %v1598
        %v1657 = vpack.c.bf16 %v1603, %v1601
        %v1658 = vpack.c.bf16 %v1604, %v1602
        %v1659 = vpack.c.bf16 %v1607, %v1605
        %v1660 = vpack.c.bf16 %v1608, %v1606
        %v1661 = vpack.c.bf16 %v1611, %v1609
        %v1662 = vpack.c.bf16 %v1612, %v1610
        %v1663 = vpack.c.bf16 %v1615, %v1613
        %v1664 = vpack.c.bf16 %v1616, %v1614
        %v1665 = vpack.c.bf16 %v1619, %v1617
        %v1666 = vpack.c.bf16 %v1620, %v1618
        %v1667 = vpack.c.bf16 %v1623, %v1621
        %v1668 = vpack.c.bf16 %v1624, %v1622
        %v1669 = vpack.c.bf16 %v1627, %v1625
        %v1670 = vpack.c.bf16 %v1628, %v1626
        %v1671 = vpack.c.bf16 %v1631, %v1629
        %v1672 = vpack.c.bf16 %v1632, %v1630
        %v1673 = vpack.c.bf16 %v1635, %v1633
        %v1674 = vpack.c.bf16 %v1636, %v1634
        %v1675 = vpack.c.bf16 %v1639, %v1637
        %v1676 = vpack.c.bf16 %v1640, %v1638
        %v1677 = vpack.c.bf16 %v1643, %v1641
        %v1678 = vpack.c.bf16 %v1644, %v1642
        %v1679 = vpack.c.bf16 %v1647, %v1645
        %v1680 = vpack.c.bf16 %v1648, %v1646
        %v1681 = vld [vmem:[#allocation7] sm:$0xf]
        %v1682 = vld [vmem:[#allocation7 + $0x4] sm:$0xf]
        %v1683 = vld [vmem:[#allocation7 + $0x8] sm:$0xf]
        %v1684 = vld [vmem:[#allocation7 + $0xc] sm:$0xf]
        %v1685 = vld [vmem:[#allocation7 + $0x10] sm:$0xf]
        %v1686 = vld [vmem:[#allocation7 + $0x14] sm:$0xf]
        %v1687 = vld [vmem:[#allocation7 + $0x18] sm:$0xf]
        %v1688 = vld [vmem:[#allocation7 + $0x1c] sm:$0xf]
        %v1689 = vld [vmem:[#allocation7 + $0x20] sm:$0xf]
        %v1690 = vld [vmem:[#allocation7 + $0x24] sm:$0xf]
        %v1691 = vld [vmem:[#allocation7 + $0x28] sm:$0xf]
        %v1692 = vld [vmem:[#allocation7 + $0x2c] sm:$0xf]
        %v1693 = vld [vmem:[#allocation7 + $0x30] sm:$0xf]
        %v1694 = vld [vmem:[#allocation7 + $0x34] sm:$0xf]
        %v1695 = vld [vmem:[#allocation7 + $0x38] sm:$0xf]
        %v1696 = vld [vmem:[#allocation7 + $0x3c] sm:$0xf]
        %v1697 = vld [vmem:[#allocation7 + $0x40] sm:$0xf]
        %v1698 = vld [vmem:[#allocation7 + $0x44] sm:$0xf]
        %v1699 = vld [vmem:[#allocation7 + $0x48] sm:$0xf]
        %v1700 = vld [vmem:[#allocation7 + $0x4c] sm:$0xf]
        %v1701 = vld [vmem:[#allocation7 + $0x50] sm:$0xf]
        %v1702 = vld [vmem:[#allocation7 + $0x54] sm:$0xf]
        %v1703 = vld [vmem:[#allocation7 + $0x58] sm:$0xf]
        %v1704 = vld [vmem:[#allocation7 + $0x5c] sm:$0xf]
        %v1705 = vld [vmem:[#allocation7 + $0x60] sm:$0xf]
        %v1706 = vld [vmem:[#allocation7 + $0x64] sm:$0xf]
        %v1707 = vld [vmem:[#allocation7 + $0x68] sm:$0xf]
        %v1708 = vld [vmem:[#allocation7 + $0x6c] sm:$0xf]
        %v1709 = vld [vmem:[#allocation7 + $0x70] sm:$0xf]
        %v1710 = vld [vmem:[#allocation7 + $0x74] sm:$0xf]
        %v1711 = vld [vmem:[#allocation7 + $0x78] sm:$0xf]
        %v1712 = vld [vmem:[#allocation7 + $0x7c] sm:$0xf]
        %v1713 = vld [vmem:[#allocation8] sm:$0xf]
        %v1714 = vld [vmem:[#allocation8 + $0x4] sm:$0xf]
        %v1715 = vld [vmem:[#allocation8 + $0x8] sm:$0xf]
        %v1716 = vld [vmem:[#allocation8 + $0xc] sm:$0xf]
        %v1717 = vld [vmem:[#allocation8 + $0x10] sm:$0xf]
        %v1718 = vld [vmem:[#allocation8 + $0x14] sm:$0xf]
        %v1719 = vld [vmem:[#allocation8 + $0x18] sm:$0xf]
        %v1720 = vld [vmem:[#allocation8 + $0x1c] sm:$0xf]
        %v1721 = vld [vmem:[#allocation8 + $0x20] sm:$0xf]
        %v1722 = vld [vmem:[#allocation8 + $0x24] sm:$0xf]
        %v1723 = vld [vmem:[#allocation8 + $0x28] sm:$0xf]
        %v1724 = vld [vmem:[#allocation8 + $0x2c] sm:$0xf]
        %v1725 = vld [vmem:[#allocation8 + $0x30] sm:$0xf]
        %v1726 = vld [vmem:[#allocation8 + $0x34] sm:$0xf]
        %v1727 = vld [vmem:[#allocation8 + $0x38] sm:$0xf]
        %v1728 = vld [vmem:[#allocation8 + $0x3c] sm:$0xf]
        %v1729 = vld [vmem:[#allocation8 + $0x40] sm:$0xf]
        %v1730 = vld [vmem:[#allocation8 + $0x44] sm:$0xf]
        %v1731 = vld [vmem:[#allocation8 + $0x48] sm:$0xf]
        %v1732 = vld [vmem:[#allocation8 + $0x4c] sm:$0xf]
        %v1733 = vld [vmem:[#allocation8 + $0x50] sm:$0xf]
        %v1734 = vld [vmem:[#allocation8 + $0x54] sm:$0xf]
        %v1735 = vld [vmem:[#allocation8 + $0x58] sm:$0xf]
        %v1736 = vld [vmem:[#allocation8 + $0x5c] sm:$0xf]
        %v1737 = vld [vmem:[#allocation8 + $0x60] sm:$0xf]
        %v1738 = vld [vmem:[#allocation8 + $0x64] sm:$0xf]
        %v1739 = vld [vmem:[#allocation8 + $0x68] sm:$0xf]
        %v1740 = vld [vmem:[#allocation8 + $0x6c] sm:$0xf]
        %v1741 = vld [vmem:[#allocation8 + $0x70] sm:$0xf]
        %v1742 = vld [vmem:[#allocation8 + $0x74] sm:$0xf]
        %v1743 = vld [vmem:[#allocation8 + $0x78] sm:$0xf]
        %v1744 = vld [vmem:[#allocation8 + $0x7c] sm:$0xf]
        %v1777 = vunpack.c.l.b16 %v1713
        %v1778 = vunpack.c.l.b16 %v1714
        %v1779 = vunpack.c.l.b16 %v1715
        %v1780 = vunpack.c.l.b16 %v1716
        %v1781 = vunpack.c.l.b16 %v1717
        %v1782 = vunpack.c.l.b16 %v1718
        %v1783 = vunpack.c.l.b16 %v1719
        %v1784 = vunpack.c.l.b16 %v1720
        %v1785 = vunpack.c.l.b16 %v1721
        %v1786 = vunpack.c.l.b16 %v1722
        %v1787 = vunpack.c.l.b16 %v1723
        %v1788 = vunpack.c.l.b16 %v1724
        %v1789 = vunpack.c.l.b16 %v1725
        %v1790 = vunpack.c.l.b16 %v1726
        %v1791 = vunpack.c.l.b16 %v1727
        %v1792 = vunpack.c.l.b16 %v1728
        %v1793 = vunpack.c.l.b16 %v1729
        %v1794 = vunpack.c.l.b16 %v1730
        %v1795 = vunpack.c.l.b16 %v1731
        %v1796 = vunpack.c.l.b16 %v1732
        %v1797 = vunpack.c.l.b16 %v1733
        %v1798 = vunpack.c.l.b16 %v1734
        %v1799 = vunpack.c.l.b16 %v1735
        %v1800 = vunpack.c.l.b16 %v1736
        %v1801 = vunpack.c.l.b16 %v1737
        %v1802 = vunpack.c.l.b16 %v1738
        %v1803 = vunpack.c.l.b16 %v1739
        %v1804 = vunpack.c.l.b16 %v1740
        %v1805 = vunpack.c.l.b16 %v1741
        %v1806 = vunpack.c.l.b16 %v1742
        %v1807 = vunpack.c.l.b16 %v1743
        %v1808 = vunpack.c.l.b16 %v1744
        %v1809 = vpack.c.b16 %v1778, %v1777
        %v1810 = vpack.c.b16 %v1780, %v1779
        %v1811 = vpack.c.b16 %v1782, %v1781
        %v1812 = vpack.c.b16 %v1784, %v1783
        %v1813 = vpack.c.b16 %v1786, %v1785
        %v1814 = vpack.c.b16 %v1788, %v1787
        %v1815 = vpack.c.b16 %v1790, %v1789
        %v1816 = vpack.c.b16 %v1792, %v1791
        %v1817 = vpack.c.b16 %v1794, %v1793
        %v1818 = vpack.c.b16 %v1796, %v1795
        %v1819 = vpack.c.b16 %v1798, %v1797
        %v1820 = vpack.c.b16 %v1800, %v1799
        %v1821 = vpack.c.b16 %v1802, %v1801
        %v1822 = vpack.c.b16 %v1804, %v1803
        %v1823 = vpack.c.b16 %v1806, %v1805
        %v1824 = vpack.c.b16 %v1808, %v1807
        %1841 = vmatprep.subr.bf16.mxu0 0
        %1842 = vmatpush1.bf16.msra.mxu0 %v1809
        %1843 = vmatprep.subr.bf16.mxu0 0
        %1844 = vmatpush1.bf16.msra.mxu0 %v1810
        %1845 = vmatprep.subr.bf16.mxu0 0
        %1846 = vmatpush1.bf16.msra.mxu0 %v1811
        %1847 = vmatprep.subr.bf16.mxu0 0
        %1848 = vmatpush1.bf16.msra.mxu0 %v1812
        %1849 = vmatprep.subr.bf16.mxu0 0
        %1850 = vmatpush1.bf16.msra.mxu0 %v1813
        %1851 = vmatprep.subr.bf16.mxu0 0
        %1852 = vmatpush1.bf16.msra.mxu0 %v1814
        %1853 = vmatprep.subr.bf16.mxu0 0
        %1854 = vmatpush1.bf16.msra.mxu0 %v1815
        %1855 = vmatprep.subr.bf16.mxu0 0
        %1856 = vmatpush1.bf16.msra.mxu0 %v1816
        %1857 = vmatprep.subr.bf16.mxu0 0
        %1858 = vmatpush1.bf16.msra.mxu0 %v1817
        %1859 = vmatprep.subr.bf16.mxu0 0
        %1860 = vmatpush1.bf16.msra.mxu0 %v1818
        %1861 = vmatprep.subr.bf16.mxu0 0
        %1862 = vmatpush1.bf16.msra.mxu0 %v1819
        %1863 = vmatprep.subr.bf16.mxu0 0
        %1864 = vmatpush1.bf16.msra.mxu0 %v1820
        %1865 = vmatprep.subr.bf16.mxu0 0
        %1866 = vmatpush1.bf16.msra.mxu0 %v1821
        %1867 = vmatprep.subr.bf16.mxu0 0
        %1868 = vmatpush1.bf16.msra.mxu0 %v1822
        %1869 = vmatprep.subr.bf16.mxu0 0
        %1870 = vmatpush1.bf16.msra.mxu0 %v1823
        %1871 = vmatprep.subr.bf16.mxu0 0
        %1872 = vmatpush1.bf16.msra.mxu0 %v1824
        %1873 = vmatprep.mubr.bf16.mxu0 %v1650
        %1874 = vmatmul.mubr.bf16.gmra.mrb[0].mxu0 %v1649
        %v1875 = vpop.f32.mrb[0].mxu0
        %v1876 = vadd.f32 0.0, %v1875
        %v1877 = vpop.f32.mrb[0].mxu0
        %v1878 = vpop.f32.mrb[0].mxu0
        %v1879 = vadd.f32 0.0, %v1878
        %v1880 = vpop.f32.mrb[0].mxu0
        %1881 = vmatprep.mubr.bf16.mxu0 %v1652
        %1882 = vmatmul.mubr.bf16.gmra.mrb[0].mxu0 %v1651
        %v1883 = vpop.f32.mrb[0].mxu0
        %v1884 = vadd.f32 0.0, %v1883
        %v1885 = vpop.f32.mrb[0].mxu0
        %v1886 = vpop.f32.mrb[0].mxu0
        %v1887 = vadd.f32 0.0, %v1886
        %v1888 = vpop.f32.mrb[0].mxu0
        %1889 = vmatprep.mubr.bf16.mxu0 %v1654
        %1890 = vmatmul.mubr.bf16.gmra.mrb[0].mxu0 %v1653
        %v1891 = vpop.f32.mrb[0].mxu0
        %v1892 = vadd.f32 0.0, %v1891
        %v1893 = vpop.f32.mrb[0].mxu0
        %v1894 = vpop.f32.mrb[0].mxu0
        %v1895 = vadd.f32 0.0, %v1894
        %v1896 = vpop.f32.mrb[0].mxu0
        %1897 = vmatprep.mubr.bf16.mxu0 %v1656
        %1898 = vmatmul.mubr.bf16.gmra.mrb[0].mxu0 %v1655
        %v1899 = vpop.f32.mrb[0].mxu0
        %v1900 = vadd.f32 0.0, %v1899
        %v1901 = vpop.f32.mrb[0].mxu0
        %v1902 = vpop.f32.mrb[0].mxu0
        %v1903 = vadd.f32 0.0, %v1902
        %v1904 = vpop.f32.mrb[0].mxu0
        %1905 = vmatprep.mubr.bf16.mxu0 %v1658
        %1906 = vmatmul.mubr.bf16.gmra.mrb[0].mxu0 %v1657
        %v1907 = vpop.f32.mrb[0].mxu0
        %v1908 = vadd.f32 0.0, %v1907
        %v1909 = vpop.f32.mrb[0].mxu0
        %v1910 = vpop.f32.mrb[0].mxu0
        %v1911 = vadd.f32 0.0, %v1910
        %v1912 = vpop.f32.mrb[0].mxu0
        %1913 = vmatprep.mubr.bf16.mxu0 %v1660
        %1914 = vmatmul.mubr.bf16.gmra.mrb[0].mxu0 %v1659
        %v1915 = vpop.f32.mrb[0].mxu0
        %v1916 = vadd.f32 0.0, %v1915
        %v1917 = vpop.f32.mrb[0].mxu0
        %v1918 = vpop.f32.mrb[0].mxu0
        %v1919 = vadd.f32 0.0, %v1918
        %v1920 = vpop.f32.mrb[0].mxu0
        %1921 = vmatprep.mubr.bf16.mxu0 %v1662
        %1922 = vmatmul.mubr.bf16.gmra.mrb[0].mxu0 %v1661
        %v1923 = vpop.f32.mrb[0].mxu0
        %v1924 = vadd.f32 0.0, %v1923
        %v1925 = vpop.f32.mrb[0].mxu0
        %v1926 = vpop.f32.mrb[0].mxu0
        %v1927 = vadd.f32 0.0, %v1926
        %v1928 = vpop.f32.mrb[0].mxu0
        %1929 = vmatprep.mubr.bf16.mxu0 %v1664
        %1930 = vmatmul.mubr.bf16.gmra.mrb[0].mxu0 %v1663
        %v1931 = vpop.f32.mrb[0].mxu0
        %v1932 = vadd.f32 0.0, %v1931
        %v1933 = vpop.f32.mrb[0].mxu0
        %v1934 = vpop.f32.mrb[0].mxu0
        %v1935 = vadd.f32 0.0, %v1934
        %v1936 = vpop.f32.mrb[0].mxu0
        %1937 = vmatprep.mubr.bf16.mxu0 %v1666
        %1938 = vmatmul.mubr.bf16.gmra.mrb[0].mxu0 %v1665
        %v1939 = vpop.f32.mrb[0].mxu0
        %v1940 = vadd.f32 0.0, %v1939
        %v1941 = vpop.f32.mrb[0].mxu0
        %v1942 = vpop.f32.mrb[0].mxu0
        %v1943 = vadd.f32 0.0, %v1942
        %v1944 = vpop.f32.mrb[0].mxu0
        %1945 = vmatprep.mubr.bf16.mxu0 %v1668
        %1946 = vmatmul.mubr.bf16.gmra.mrb[0].mxu0 %v1667
        %v1947 = vpop.f32.mrb[0].mxu0
        %v1948 = vadd.f32 0.0, %v1947
        %v1949 = vpop.f32.mrb[0].mxu0
        %v1950 = vpop.f32.mrb[0].mxu0
        %v1951 = vadd.f32 0.0, %v1950
        %v1952 = vpop.f32.mrb[0].mxu0
        %1953 = vmatprep.mubr.bf16.mxu0 %v1670
        %1954 = vmatmul.mubr.bf16.gmra.mrb[0].mxu0 %v1669
        %v1955 = vpop.f32.mrb[0].mxu0
        %v1956 = vadd.f32 0.0, %v1955
        %v1957 = vpop.f32.mrb[0].mxu0
        %v1958 = vpop.f32.mrb[0].mxu0
        %v1959 = vadd.f32 0.0, %v1958
        %v1960 = vpop.f32.mrb[0].mxu0
        %1961 = vmatprep.mubr.bf16.mxu0 %v1672
        %1962 = vmatmul.mubr.bf16.gmra.mrb[0].mxu0 %v1671
        %v1963 = vpop.f32.mrb[0].mxu0
        %v1964 = vadd.f32 0.0, %v1963
        %v1965 = vpop.f32.mrb[0].mxu0
        %v1966 = vpop.f32.mrb[0].mxu0
        %v1967 = vadd.f32 0.0, %v1966
        %v1968 = vpop.f32.mrb[0].mxu0
        %1969 = vmatprep.mubr.bf16.mxu0 %v1674
        %1970 = vmatmul.mubr.bf16.gmra.mrb[0].mxu0 %v1673
        %v1971 = vpop.f32.mrb[0].mxu0
        %v1972 = vadd.f32 0.0, %v1971
        %v1973 = vpop.f32.mrb[0].mxu0
        %v1974 = vpop.f32.mrb[0].mxu0
        %v1975 = vadd.f32 0.0, %v1974
        %v1976 = vpop.f32.mrb[0].mxu0
        %1977 = vmatprep.mubr.bf16.mxu0 %v1676
        %1978 = vmatmul.mubr.bf16.gmra.mrb[0].mxu0 %v1675
        %v1979 = vpop.f32.mrb[0].mxu0
        %v1980 = vadd.f32 0.0, %v1979
        %v1981 = vpop.f32.mrb[0].mxu0
        %v1982 = vpop.f32.mrb[0].mxu0
        %v1983 = vadd.f32 0.0, %v1982
        %v1984 = vpop.f32.mrb[0].mxu0
        %1985 = vmatprep.mubr.bf16.mxu0 %v1678
        %1986 = vmatmul.mubr.bf16.gmra.mrb[0].mxu0 %v1677
        %v1987 = vpop.f32.mrb[0].mxu0
        %v1988 = vadd.f32 0.0, %v1987
        %v1989 = vpop.f32.mrb[0].mxu0
        %v1990 = vpop.f32.mrb[0].mxu0
        %v1991 = vadd.f32 0.0, %v1990
        %v1992 = vpop.f32.mrb[0].mxu0
        %1993 = vmatprep.mubr.bf16.mxu0 %v1680
        %1994 = vmatmul.mubr.bf16.gmra.mrb[0].mxu0 %v1679
        %v1995 = vpop.f32.mrb[0].mxu0
        %v1996 = vadd.f32 0.0, %v1995
        %v1997 = vpop.f32.mrb[0].mxu0
        %v1998 = vpop.f32.mrb[0].mxu0
        %v1999 = vadd.f32 0.0, %v1998
        %v2000 = vpop.f32.mrb[0].mxu0
        %2001 = vdwg.mxu0
        %v2034 = vunpack.c.l.b16 %v1681
        %v2035 = vunpack.c.l.b16 %v1682
        %v2036 = vunpack.c.l.b16 %v1683
        %v2037 = vunpack.c.l.b16 %v1684
        %v2038 = vunpack.c.l.b16 %v1685
        %v2039 = vunpack.c.l.b16 %v1686
        %v2040 = vunpack.c.l.b16 %v1687
        %v2041 = vunpack.c.l.b16 %v1688
        %v2042 = vunpack.c.l.b16 %v1689
        %v2043 = vunpack.c.l.b16 %v1690
        %v2044 = vunpack.c.l.b16 %v1691
        %v2045 = vunpack.c.l.b16 %v1692
        %v2046 = vunpack.c.l.b16 %v1693
        %v2047 = vunpack.c.l.b16 %v1694
        %v2048 = vunpack.c.l.b16 %v1695
        %v2049 = vunpack.c.l.b16 %v1696
        %v2050 = vunpack.c.l.b16 %v1697
        %v2051 = vunpack.c.l.b16 %v1698
        %v2052 = vunpack.c.l.b16 %v1699
        %v2053 = vunpack.c.l.b16 %v1700
        %v2054 = vunpack.c.l.b16 %v1701
        %v2055 = vunpack.c.l.b16 %v1702
        %v2056 = vunpack.c.l.b16 %v1703
        %v2057 = vunpack.c.l.b16 %v1704
        %v2058 = vunpack.c.l.b16 %v1705
        %v2059 = vunpack.c.l.b16 %v1706
        %v2060 = vunpack.c.l.b16 %v1707
        %v2061 = vunpack.c.l.b16 %v1708
        %v2062 = vunpack.c.l.b16 %v1709
        %v2063 = vunpack.c.l.b16 %v1710
        %v2064 = vunpack.c.l.b16 %v1711
        %v2065 = vunpack.c.l.b16 %v1712
        %v2066 = vpack.c.b16 %v2035, %v2034
        %v2067 = vpack.c.b16 %v2037, %v2036
        %v2068 = vpack.c.b16 %v2039, %v2038
        %v2069 = vpack.c.b16 %v2041, %v2040
        %v2070 = vpack.c.b16 %v2043, %v2042
        %v2071 = vpack.c.b16 %v2045, %v2044
        %v2072 = vpack.c.b16 %v2047, %v2046
        %v2073 = vpack.c.b16 %v2049, %v2048
        %v2074 = vpack.c.b16 %v2051, %v2050
        %v2075 = vpack.c.b16 %v2053, %v2052
        %v2076 = vpack.c.b16 %v2055, %v2054
        %v2077 = vpack.c.b16 %v2057, %v2056
        %v2078 = vpack.c.b16 %v2059, %v2058
        %v2079 = vpack.c.b16 %v2061, %v2060
        %v2080 = vpack.c.b16 %v2063, %v2062
        %v2081 = vpack.c.b16 %v2065, %v2064
        %2098 = vmatprep.subr.bf16.mxu0 0
        %2099 = vmatpush1.bf16.msra.mxu0 %v2066
        %2100 = vmatprep.subr.bf16.mxu0 0
        %2101 = vmatpush1.bf16.msra.mxu0 %v2067
        %2102 = vmatprep.subr.bf16.mxu0 0
        %2103 = vmatpush1.bf16.msra.mxu0 %v2068
        %2104 = vmatprep.subr.bf16.mxu0 0
        %2105 = vmatpush1.bf16.msra.mxu0 %v2069
        %2106 = vmatprep.subr.bf16.mxu0 0
        %2107 = vmatpush1.bf16.msra.mxu0 %v2070
        %2108 = vmatprep.subr.bf16.mxu0 0
        %2109 = vmatpush1.bf16.msra.mxu0 %v2071
        %2110 = vmatprep.subr.bf16.mxu0 0
        %2111 = vmatpush1.bf16.msra.mxu0 %v2072
        %2112 = vmatprep.subr.bf16.mxu0 0
        %2113 = vmatpush1.bf16.msra.mxu0 %v2073
        %2114 = vmatprep.subr.bf16.mxu0 0
        %2115 = vmatpush1.bf16.msra.mxu0 %v2074
        %2116 = vmatprep.subr.bf16.mxu0 0
        %2117 = vmatpush1.bf16.msra.mxu0 %v2075
        %2118 = vmatprep.subr.bf16.mxu0 0
        %2119 = vmatpush1.bf16.msra.mxu0 %v2076
        %2120 = vmatprep.subr.bf16.mxu0 0
        %2121 = vmatpush1.bf16.msra.mxu0 %v2077
        %2122 = vmatprep.subr.bf16.mxu0 0
        %2123 = vmatpush1.bf16.msra.mxu0 %v2078
        %2124 = vmatprep.subr.bf16.mxu0 0
        %2125 = vmatpush1.bf16.msra.mxu0 %v2079
        %2126 = vmatprep.subr.bf16.mxu0 0
        %2127 = vmatpush1.bf16.msra.mxu0 %v2080
        %2128 = vmatprep.subr.bf16.mxu0 0
        %2129 = vmatpush1.bf16.msra.mxu0 %v2081
        %2130 = vmatprep.mubr.bf16.mxu0 %v1490
        %2131 = vmatmul.mubr.bf16.gmra.mrb[0].mxu0 %v1489
        %v2132 = vpop.f32.mrb[0].mxu0
        %v2133 = vadd.f32 %v1876, %v2132
        %v2134 = vpop.f32.mrb[0].mxu0
        %v2135 = vpop.f32.mrb[0].mxu0
        %v2136 = vadd.f32 %v1879, %v2135
        %v2137 = vpop.f32.mrb[0].mxu0
        %2138 = vmatprep.mubr.bf16.mxu0 %v1492
        %2139 = vmatmul.mubr.bf16.gmra.mrb[0].mxu0 %v1491
        %v2140 = vpop.f32.mrb[0].mxu0
        %v2141 = vadd.f32 %v1884, %v2140
        %v2142 = vpop.f32.mrb[0].mxu0
        %v2143 = vpop.f32.mrb[0].mxu0
        %v2144 = vadd.f32 %v1887, %v2143
        %v2145 = vpop.f32.mrb[0].mxu0
        %2146 = vmatprep.mubr.bf16.mxu0 %v1494
        %2147 = vmatmul.mubr.bf16.gmra.mrb[0].mxu0 %v1493
        %v2148 = vpop.f32.mrb[0].mxu0
        %v2149 = vadd.f32 %v1892, %v2148
        %v2150 = vpop.f32.mrb[0].mxu0
        %v2151 = vpop.f32.mrb[0].mxu0
        %v2152 = vadd.f32 %v1895, %v2151
        %v2153 = vpop.f32.mrb[0].mxu0
        %2154 = vmatprep.mubr.bf16.mxu0 %v1496
        %2155 = vmatmul.mubr.bf16.gmra.mrb[0].mxu0 %v1495
        %v2156 = vpop.f32.mrb[0].mxu0
        %v2157 = vadd.f32 %v1900, %v2156
        %v2158 = vpop.f32.mrb[0].mxu0
        %v2159 = vpop.f32.mrb[0].mxu0
        %v2160 = vadd.f32 %v1903, %v2159
        %v2161 = vpop.f32.mrb[0].mxu0
        %2162 = vmatprep.mubr.bf16.mxu0 %v1498
        %2163 = vmatmul.mubr.bf16.gmra.mrb[0].mxu0 %v1497
        %v2164 = vpop.f32.mrb[0].mxu0
        %v2165 = vadd.f32 %v1908, %v2164
        %v2166 = vpop.f32.mrb[0].mxu0
        %v2167 = vpop.f32.mrb[0].mxu0
        %v2168 = vadd.f32 %v1911, %v2167
        %v2169 = vpop.f32.mrb[0].mxu0
        %2170 = vmatprep.mubr.bf16.mxu0 %v1500
        %2171 = vmatmul.mubr.bf16.gmra.mrb[0].mxu0 %v1499
        %v2172 = vpop.f32.mrb[0].mxu0
        %v2173 = vadd.f32 %v1916, %v2172
        %v2174 = vpop.f32.mrb[0].mxu0
        %v2175 = vpop.f32.mrb[0].mxu0
        %v2176 = vadd.f32 %v1919, %v2175
        %v2177 = vpop.f32.mrb[0].mxu0
        %2178 = vmatprep.mubr.bf16.mxu0 %v1502
        %2179 = vmatmul.mubr.bf16.gmra.mrb[0].mxu0 %v1501
        %v2180 = vpop.f32.mrb[0].mxu0
        %v2181 = vadd.f32 %v1924, %v2180
        %v2182 = vpop.f32.mrb[0].mxu0
        %v2183 = vpop.f32.mrb[0].mxu0
        %v2184 = vadd.f32 %v1927, %v2183
        %v2185 = vpop.f32.mrb[0].mxu0
        %2186 = vmatprep.mubr.bf16.mxu0 %v1504
        %2187 = vmatmul.mubr.bf16.gmra.mrb[0].mxu0 %v1503
        %v2188 = vpop.f32.mrb[0].mxu0
        %v2189 = vadd.f32 %v1932, %v2188
        %v2190 = vpop.f32.mrb[0].mxu0
        %v2191 = vpop.f32.mrb[0].mxu0
        %v2192 = vadd.f32 %v1935, %v2191
        %v2193 = vpop.f32.mrb[0].mxu0
        %2194 = vmatprep.mubr.bf16.mxu0 %v1506
        %2195 = vmatmul.mubr.bf16.gmra.mrb[0].mxu0 %v1505
        %v2196 = vpop.f32.mrb[0].mxu0
        %v2197 = vadd.f32 %v1940, %v2196
        %v2198 = vpop.f32.mrb[0].mxu0
        %v2199 = vpop.f32.mrb[0].mxu0
        %v2200 = vadd.f32 %v1943, %v2199
        %v2201 = vpop.f32.mrb[0].mxu0
        %2202 = vmatprep.mubr.bf16.mxu0 %v1508
        %2203 = vmatmul.mubr.bf16.gmra.mrb[0].mxu0 %v1507
        %v2204 = vpop.f32.mrb[0].mxu0
        %v2205 = vadd.f32 %v1948, %v2204
        %v2206 = vpop.f32.mrb[0].mxu0
        %v2207 = vpop.f32.mrb[0].mxu0
        %v2208 = vadd.f32 %v1951, %v2207
        %v2209 = vpop.f32.mrb[0].mxu0
        %2210 = vmatprep.mubr.bf16.mxu0 %v1510
        %2211 = vmatmul.mubr.bf16.gmra.mrb[0].mxu0 %v1509
        %v2212 = vpop.f32.mrb[0].mxu0
        %v2213 = vadd.f32 %v1956, %v2212
        %v2214 = vpop.f32.mrb[0].mxu0
        %v2215 = vpop.f32.mrb[0].mxu0
        %v2216 = vadd.f32 %v1959, %v2215
        %v2217 = vpop.f32.mrb[0].mxu0
        %2218 = vmatprep.mubr.bf16.mxu0 %v1512
        %2219 = vmatmul.mubr.bf16.gmra.mrb[0].mxu0 %v1511
        %v2220 = vpop.f32.mrb[0].mxu0
        %v2221 = vadd.f32 %v1964, %v2220
        %v2222 = vpop.f32.mrb[0].mxu0
        %v2223 = vpop.f32.mrb[0].mxu0
        %v2224 = vadd.f32 %v1967, %v2223
        %v2225 = vpop.f32.mrb[0].mxu0
        %2226 = vmatprep.mubr.bf16.mxu0 %v1514
        %2227 = vmatmul.mubr.bf16.gmra.mrb[0].mxu0 %v1513
        %v2228 = vpop.f32.mrb[0].mxu0
        %v2229 = vadd.f32 %v1972, %v2228
        %v2230 = vpop.f32.mrb[0].mxu0
        %v2231 = vpop.f32.mrb[0].mxu0
        %v2232 = vadd.f32 %v1975, %v2231
        %v2233 = vpop.f32.mrb[0].mxu0
        %2234 = vmatprep.mubr.bf16.mxu0 %v1516
        %2235 = vmatmul.mubr.bf16.gmra.mrb[0].mxu0 %v1515
        %v2236 = vpop.f32.mrb[0].mxu0
        %v2237 = vadd.f32 %v1980, %v2236
        %v2238 = vpop.f32.mrb[0].mxu0
        %v2239 = vpop.f32.mrb[0].mxu0
        %v2240 = vadd.f32 %v1983, %v2239
        %v2241 = vpop.f32.mrb[0].mxu0
        %2242 = vmatprep.mubr.bf16.mxu0 %v1518
        %2243 = vmatmul.mubr.bf16.gmra.mrb[0].mxu0 %v1517
        %v2244 = vpop.f32.mrb[0].mxu0
        %v2245 = vadd.f32 %v1988, %v2244
        %v2246 = vpop.f32.mrb[0].mxu0
        %v2247 = vpop.f32.mrb[0].mxu0
        %v2248 = vadd.f32 %v1991, %v2247
        %v2249 = vpop.f32.mrb[0].mxu0
        %2250 = vmatprep.mubr.bf16.mxu0 %v1520
        %2251 = vmatmul.mubr.bf16.gmra.mrb[0].mxu0 %v1519
        %v2252 = vpop.f32.mrb[0].mxu0
        %v2253 = vadd.f32 %v1996, %v2252
        %v2254 = vpop.f32.mrb[0].mxu0
        %v2255 = vpop.f32.mrb[0].mxu0
        %v2256 = vadd.f32 %v1999, %v2255
        %v2257 = vpop.f32.mrb[0].mxu0
        %2258 = vdwg.mxu0
        %v2259 = vld [vmem:[%s4] sm:$0x1]
        %v2261 = vlaneseq
        %v2262 = vshrl.u32 %v2261, 7
        %v2263 = vsub.s32 0, %v2262
        %v2264 = vrot.slane %v2259, %v2263
        %v2266 = vadd.f32 %v2133, %v2264
        %v2267 = vadd.f32 %v2136, %v2264
        %v2268 = vadd.f32 %v2141, %v2264
        %v2269 = vadd.f32 %v2144, %v2264
        %v2270 = vadd.f32 %v2149, %v2264
        %v2271 = vadd.f32 %v2152, %v2264
        %v2272 = vadd.f32 %v2157, %v2264
        %v2273 = vadd.f32 %v2160, %v2264
        %v2274 = vadd.f32 %v2165, %v2264
        %v2275 = vadd.f32 %v2168, %v2264
        %v2276 = vadd.f32 %v2173, %v2264
        %v2277 = vadd.f32 %v2176, %v2264
        %v2278 = vadd.f32 %v2181, %v2264
        %v2279 = vadd.f32 %v2184, %v2264
        %v2280 = vadd.f32 %v2189, %v2264
        %v2281 = vadd.f32 %v2192, %v2264
        %v2282 = vadd.f32 %v2197, %v2264
        %v2283 = vadd.f32 %v2200, %v2264
        %v2284 = vadd.f32 %v2205, %v2264
        %v2285 = vadd.f32 %v2208, %v2264
        %v2286 = vadd.f32 %v2213, %v2264
        %v2287 = vadd.f32 %v2216, %v2264
        %v2288 = vadd.f32 %v2221, %v2264
        %v2289 = vadd.f32 %v2224, %v2264
        %v2290 = vadd.f32 %v2229, %v2264
        %v2291 = vadd.f32 %v2232, %v2264
        %v2292 = vadd.f32 %v2237, %v2264
        %v2293 = vadd.f32 %v2240, %v2264
        %v2294 = vadd.f32 %v2245, %v2264
        %v2295 = vadd.f32 %v2248, %v2264
        %v2296 = vadd.f32 %v2253, %v2264
        %v2297 = vadd.f32 %v2256, %v2264
        %v2298 = vpack.c.bf16 %v2267, %v2266
        %v2299 = vpack.c.bf16 %v2269, %v2268
        %v2300 = vpack.c.bf16 %v2271, %v2270
        %v2301 = vpack.c.bf16 %v2273, %v2272
        %v2302 = vpack.c.bf16 %v2275, %v2274
        %v2303 = vpack.c.bf16 %v2277, %v2276
        %v2304 = vpack.c.bf16 %v2279, %v2278
        %v2305 = vpack.c.bf16 %v2281, %v2280
        %v2306 = vpack.c.bf16 %v2283, %v2282
        %v2307 = vpack.c.bf16 %v2285, %v2284
        %v2308 = vpack.c.bf16 %v2287, %v2286
        %v2309 = vpack.c.bf16 %v2289, %v2288
        %v2310 = vpack.c.bf16 %v2291, %v2290
        %v2311 = vpack.c.bf16 %v2293, %v2292
        %v2312 = vpack.c.bf16 %v2295, %v2294
        %v2313 = vpack.c.bf16 %v2297, %v2296
        %v2330 = vunpack.c.l.b16 %v2298
        %v2331 = vunpack.c.h.b16 %v2298
        %v2332 = vunpack.c.l.b16 %v2299
        %v2333 = vunpack.c.h.b16 %v2299
        %v2334 = vunpack.c.l.b16 %v2300
        %v2335 = vunpack.c.h.b16 %v2300
        %v2336 = vunpack.c.l.b16 %v2301
        %v2337 = vunpack.c.h.b16 %v2301
        %v2338 = vunpack.c.l.b16 %v2302
        %v2339 = vunpack.c.h.b16 %v2302
        %v2340 = vunpack.c.l.b16 %v2303
        %v2341 = vunpack.c.h.b16 %v2303
        %v2342 = vunpack.c.l.b16 %v2304
        %v2343 = vunpack.c.h.b16 %v2304
        %v2344 = vunpack.c.l.b16 %v2305
        %v2345 = vunpack.c.h.b16 %v2305
        %v2346 = vunpack.c.l.b16 %v2306
        %v2347 = vunpack.c.h.b16 %v2306
        %v2348 = vunpack.c.l.b16 %v2307
        %v2349 = vunpack.c.h.b16 %v2307
        %v2350 = vunpack.c.l.b16 %v2308
        %v2351 = vunpack.c.h.b16 %v2308
        %v2352 = vunpack.c.l.b16 %v2309
        %v2353 = vunpack.c.h.b16 %v2309
        %v2354 = vunpack.c.l.b16 %v2310
        %v2355 = vunpack.c.h.b16 %v2310
        %v2356 = vunpack.c.l.b16 %v2311
        %v2357 = vunpack.c.h.b16 %v2311
        %v2358 = vunpack.c.l.b16 %v2312
        %v2359 = vunpack.c.h.b16 %v2312
        %v2360 = vunpack.c.l.b16 %v2313
        %v2361 = vunpack.c.h.b16 %v2313
        %v2362 = vpack.c.b16 %v2330, %v2330
        %v2363 = vpack.c.b16 %v2331, %v2331
        %v2364 = vpack.c.b16 %v2332, %v2332
        %v2365 = vpack.c.b16 %v2333, %v2333
        %v2366 = vpack.c.b16 %v2334, %v2334
        %v2367 = vpack.c.b16 %v2335, %v2335
        %v2368 = vpack.c.b16 %v2336, %v2336
        %v2369 = vpack.c.b16 %v2337, %v2337
        %v2370 = vpack.c.b16 %v2338, %v2338
        %v2371 = vpack.c.b16 %v2339, %v2339
        %v2372 = vpack.c.b16 %v2340, %v2340
        %v2373 = vpack.c.b16 %v2341, %v2341
        %v2374 = vpack.c.b16 %v2342, %v2342
        %v2375 = vpack.c.b16 %v2343, %v2343
        %v2376 = vpack.c.b16 %v2344, %v2344
        %v2377 = vpack.c.b16 %v2345, %v2345
        %v2378 = vpack.c.b16 %v2346, %v2346
        %v2379 = vpack.c.b16 %v2347, %v2347
        %v2380 = vpack.c.b16 %v2348, %v2348
        %v2381 = vpack.c.b16 %v2349, %v2349
        %v2382 = vpack.c.b16 %v2350, %v2350
        %v2383 = vpack.c.b16 %v2351, %v2351
        %v2384 = vpack.c.b16 %v2352, %v2352
        %v2385 = vpack.c.b16 %v2353, %v2353
        %v2386 = vpack.c.b16 %v2354, %v2354
        %v2387 = vpack.c.b16 %v2355, %v2355
        %v2388 = vpack.c.b16 %v2356, %v2356
        %v2389 = vpack.c.b16 %v2357, %v2357
        %v2390 = vpack.c.b16 %v2358, %v2358
        %v2391 = vpack.c.b16 %v2359, %v2359
        %v2392 = vpack.c.b16 %v2360, %v2360
        %v2393 = vpack.c.b16 %v2361, %v2361
        %2426 = vst [vmem:[%s364] sm:$0xf] %v2362
        %2427 = vst [vmem:[%s364 + $0x4] sm:$0xf] %v2363
        %2428 = vst [vmem:[%s364 + $0x8] sm:$0xf] %v2364
        %2429 = vst [vmem:[%s364 + $0xc] sm:$0xf] %v2365
        %2430 = vst [vmem:[%s364 + $0x10] sm:$0xf] %v2366
        %2431 = vst [vmem:[%s364 + $0x14] sm:$0xf] %v2367
        %2432 = vst [vmem:[%s364 + $0x18] sm:$0xf] %v2368
        %2433 = vst [vmem:[%s364 + $0x1c] sm:$0xf] %v2369
        %2434 = vst [vmem:[%s364 + $0x20] sm:$0xf] %v2370
        %2435 = vst [vmem:[%s364 + $0x24] sm:$0xf] %v2371
        %2436 = vst [vmem:[%s364 + $0x28] sm:$0xf] %v2372
        %2437 = vst [vmem:[%s364 + $0x2c] sm:$0xf] %v2373
        %2438 = vst [vmem:[%s364 + $0x30] sm:$0xf] %v2374
        %2439 = vst [vmem:[%s364 + $0x34] sm:$0xf] %v2375
        %2440 = vst [vmem:[%s364 + $0x38] sm:$0xf] %v2376
        %2441 = vst [vmem:[%s364 + $0x3c] sm:$0xf] %v2377
        %2442 = vst [vmem:[%s364 + $0x40] sm:$0xf] %v2378
        %2443 = vst [vmem:[%s364 + $0x44] sm:$0xf] %v2379
        %2444 = vst [vmem:[%s364 + $0x48] sm:$0xf] %v2380
        %2445 = vst [vmem:[%s364 + $0x4c] sm:$0xf] %v2381
        %2446 = vst [vmem:[%s364 + $0x50] sm:$0xf] %v2382
        %2447 = vst [vmem:[%s364 + $0x54] sm:$0xf] %v2383
        %2448 = vst [vmem:[%s364 + $0x58] sm:$0xf] %v2384
        %2449 = vst [vmem:[%s364 + $0x5c] sm:$0xf] %v2385
        %2450 = vst [vmem:[%s364 + $0x60] sm:$0xf] %v2386
        %2451 = vst [vmem:[%s364 + $0x64] sm:$0xf] %v2387
        %2452 = vst [vmem:[%s364 + $0x68] sm:$0xf] %v2388
        %2453 = vst [vmem:[%s364 + $0x6c] sm:$0xf] %v2389
        %2454 = vst [vmem:[%s364 + $0x70] sm:$0xf] %v2390
        %2455 = vst [vmem:[%s364 + $0x74] sm:$0xf] %v2391
        %2456 = vst [vmem:[%s364 + $0x78] sm:$0xf] %v2392
        %2457 = vst [vmem:[%s364 + $0x7c] sm:$0xf] %v2393
        %s2458 = sand.u32 %s149, 1
        %s2459 = scalar_lea.sflag [#allocation4], %s2458
        %s2460 = sand.u32 %s149, 1
        %s2461 = smul.addr %s2460, 128
        %s2462 = scalar_lea.vmem [#allocation10], %s2461
        // Predicated region
        $region57: #{tpu_custom_call.1} parent=39 // pred_check
          %p2463 = pneg %p159
        $region58: #{tpu_custom_call.1} parent=39 // pred_check_branch
          %2465 = sbr.rel (%p2463) target = $region60
        $region59: #{tpu_custom_call.1} parent=39 // pred_region
          %s2466 = smul.u32 32, %s26
          %s2468 = ssub.s32 2048, 2048
          %2469 = vsyncadd %s2459, %s2468
          %s2470 = smul.addr %s2466, 64
          %s2471 = scalar_lea.hbm %s5, %s2470
          %s2472 = sshll.u32 %s2462, 4
          %s2473 = int_to_ptr.vmem [resolvable:$true] %s2472
          %2478 = dma.vmem_to_hbm [thread:$0]  %s2473, 2048, %s2471, %s2459, 64, 64, 4
        $region60: #{tpu_custom_call.1} parent=39 // pred_fallthru
          _
      $region40: #{tpu_custom_call.1} parent=5 // pred_fallthru
        _
      %p2479 = scmp.le.s32.totalorder 2, %s21
      // Predicated region
      $region61: #{tpu_custom_call.1} parent=5 // pred_check
        %p2480 = pneg %p2479
      $region62: #{tpu_custom_call.1} parent=5 // pred_check_branch
        %2482 = sbr.rel (%p2480) target = $region64
      $region63: #{tpu_custom_call.1} parent=5 // pred_region
        %s2483 = ssub.s32 %s21, 2
        // Predicated region
        $region65: #{tpu_custom_call.1} parent=63 // pred_check
          %p2484 = pneg %p165
        $region66: #{tpu_custom_call.1} parent=63 // pred_check_branch
          %2486 = sbr.rel (%p2484) target = $region68
        $region67: #{tpu_custom_call.1} parent=63 // pred_region
          %s2487 = sand.u32 %s150, 1
          %s2488 = scalar_lea.sflag [#allocation4], %s2487
          %s2489 = sand.u32 %s150, 1
          %s2490 = smul.addr %s2489, 128
          %s2491 = scalar_lea.vmem [#allocation10], %s2490
          %2492 = dma.done %s2488, 2048
        $region68: #{tpu_custom_call.1} parent=63 // pred_fallthru
          _
      $region64: #{tpu_custom_call.1} parent=5 // pred_fallthru
        _
    $region6: #{tpu_custom_call.1} parent=1 // loop_footer
      %s25 = sadd.s32 1, %s21
    $region7: #{tpu_custom_call.1} parent=1 // loop_footer_branch
      %20 = sbr.rel target = $region3
    $region8: #{tpu_custom_call.1} parent=1 // loop_exit
      _
    %2493 = vsyncpa [#allocation3], 1
    %s2494 = scalar_lea.sflag [#allocation3], 1
    %2495 = vsyncpa %s2494, 1
    %2496 = vsyncpa [#allocation6], 1
    %s2497 = scalar_lea.sflag [#allocation6], 1
    %2498 = vsyncpa %s2497, 1
    %2499 = vsyncpa [#allocation9], 1
    %2500 = vsyncpa [#allocation4], 1
    %s2501 = scalar_lea.sflag [#allocation4], 1
    %2502 = vsyncpa %s2501, 1

</llo_original>
